<compile_context>
chip_gen: v5e
topology: v5e:2x2
jax: 0.10.0
libtpu: 0.0.40
codegen_flags: <defaults>
</compile_context>

<pallas_src>
import functools
import math

import jax
import jax.numpy as jnp
from jax import lax
from jax.experimental import pallas as pl
from jax.experimental.pallas import tpu as pltpu


# -----------------------------------------------------------------------------
# Fused Pallas kernel: normalize(x) -> [GRU1_l || GRU1_r] -> [GRU2_l || GRU2_r]
#                      -> fc -> softmax
# -----------------------------------------------------------------------------
def _mygru_fused_kernel(x_ref, y_ref, vec_ref, mat1_ref, mat2_ref, wfc_ref, bfc_ref,
                        out_ref, *, hidden, t_x, t_y, gate_stride):
    """
    x_ref   : (B, Tx) raw x series (normalized in-kernel)
    y_ref   : (B, Ty) raw y series
    vec_ref : (11, 2H) f32 packed row vectors (fused [left | right] layout):
              0..2  layer-1 W_ih per gate r,z,n (Din=1 -> a (2H,) row each)
              3,4   layer-1 (b_ih + b_hh) for gates r,z
              5,6   layer-1 b_ih_n, b_hh_n
              7,8   layer-2 (b_ih + b_hh) for gates r,z
              9,10  layer-2 b_ih_n, b_hh_n
    mat1_ref: (2H, 3*G) bf16 -- layer-1 block-diag W_hh^T, gates r|z|n each in its own
              G(=128)-lane block (zero-padded 2H -> G)
    mat2_ref: (2H, 3*G) bf16 -- layer-2 block-diag W_ih^T, same layout
    wfc_ref : (2H, C) bf16   -- W_fc^T
    bfc_ref : (1, C)  f32
    out_ref : (B, C)  f32 softmax probabilities
    """
    H = hidden
    H2 = 2 * H
    G = gate_stride
    B = x_ref.shape[0]
    t_max = max(t_x, t_y)

    # ---- layer-1 loop-invariant loads only (layer-2 loads sunk below the recurrence) ----
    w1_r = vec_ref[0:1, :]
    w1_z = vec_ref[1:2, :]
    w1_n = vec_ref[2:3, :]
    b1_r = vec_ref[3:4, :]
    b1_z = vec_ref[4:5, :]
    b1i_n = vec_ref[5:6, :]
    b1h_n = vec_ref[6:7, :]
    mat1 = mat1_ref[...]                     # (2H, 3G) bf16, loaded once, reused every step

    # ---- F.normalize(x, dim=1): L2 over the time axis, clamped at 1e-12 ----
    xv = x_ref[...].astype(jnp.float32)                               # (B, Tx)
    yv = y_ref[...].astype(jnp.float32)                               # (B, Ty)
    nrm = jnp.sqrt(jnp.sum(xv * xv, axis=1, keepdims=True))           # (B, 1)
    xv = xv / jnp.maximum(nrm, 1e-12)

    # column mask: first H lanes belong to the left (x) branch, next H to the right (y)
    left_cols = lax.broadcasted_iota(jnp.int32, (B, H2), 1) < H       # (B, 2H) bool
    zeros_col = jnp.zeros((B, 1), jnp.float32)

    # ---- layer-1 recurrence: both branches advance via ONE fused block-diag gate matmul ----
    # Fully unrolled (T static); h carried in registers; input-side gate preactivations are
    # computed inline per step (h-independent -> overlapped with the previous step's matmul,
    # and not held live across the whole loop).
    h = jnp.zeros((B, H2), jnp.float32)
    for t in range(t_max):
        xl = xv[:, t:t + 1] if t < t_x else zeros_col                 # (B, 1)
        yr = yv[:, t:t + 1] if t < t_y else zeros_col                 # (B, 1)
        xy = jnp.where(left_cols,
                       jnp.broadcast_to(xl, (B, H2)),
                       jnp.broadcast_to(yr, (B, H2)))                 # (B, 2H)
        gi_r = xy * w1_r + b1_r                                       # b_ih + b_hh folded in
        gi_z = xy * w1_z + b1_z
        gi_n = xy * w1_n + b1i_n

        # single bf16 MXU push per step; gates read back at 128-lane block offsets
        gh = jnp.dot(h.astype(jnp.bfloat16), mat1,
                     preferred_element_type=jnp.float32)              # (B, 3G)
        r = jax.nn.sigmoid(gi_r + gh[:, 0:H2])
        z = jax.nn.sigmoid(gi_z + gh[:, G:G + H2])
        n = jnp.tanh(gi_n + r * (gh[:, 2 * G:2 * G + H2] + b1h_n))
        h_new = (1.0 - z) * n + z * h
        if t < t_x and t < t_y:            # both branches active (compile-time decision)
            h = h_new
        elif t < t_x:                      # only left branch still running
            h = jnp.where(left_cols, h_new, h)
        else:                              # only right branch still running
            h = jnp.where(left_cols, h, h_new)

    # ---- layer-2 GRUs: seq len 1, zero initial hidden => gh = b_hh, h2 = (1-z)*n ----
    # (loads appear only here so their live ranges don't start before the loop)
    b2_r = vec_ref[7:8, :]
    b2_z = vec_ref[8:9, :]
    b2i_n = vec_ref[9:10, :]
    b2h_n = vec_ref[10:11, :]
    g2 = jnp.dot(h.astype(jnp.bfloat16), mat2_ref[...],
                 preferred_element_type=jnp.float32)                  # (B, 3G)
    r2 = jax.nn.sigmoid(g2[:, 0:H2] + b2_r)
    z2 = jax.nn.sigmoid(g2[:, G:G + H2] + b2_z)
    n2 = jnp.tanh(g2[:, 2 * G:2 * G + H2] + b2i_n + r2 * b2h_n)
    h2 = (1.0 - z2) * n2                                              # (B, 2H) = [x_final | y_final]

    # ---- fc + softmax; fused [left | right] layout == torch.cat([x, y], dim=-1) ----
    logits = jnp.dot(h2.astype(jnp.bfloat16), wfc_ref[...],
                     preferred_element_type=jnp.float32) + bfc_ref[...]
    m = jnp.max(logits, axis=-1, keepdims=True)
    e = jnp.exp(logits - m)
    out_ref[...] = e * pl.reciprocal(jnp.sum(e, axis=-1, keepdims=True), approx=True)


# -----------------------------------------------------------------------------
# One-time weight packing (done once; per-call wrapper has no layout ops)
# -----------------------------------------------------------------------------
def pack_params(params, hidden):
    H = hidden
    H2 = 2 * H
    gate_stride = ((H2 + 127) // 128) * 128    # one vreg-aligned lane block per gate

    def gate(w, g):                      # rows of gate g in PyTorch [r|z|n] order
        return w[g * H:(g + 1) * H]

    def cat_vec(a, b):                   # (H,), (H,) -> (1, 2H)
        return jnp.concatenate([a, b])[None, :]

    def block_diag_T(a, b):              # a,b: (H,H) torch (out,in) -> (2H,2H) for h @ M
        z = jnp.zeros((H, H), jnp.float32)
        return jnp.concatenate(
            [jnp.concatenate([a.T, z], axis=1),
             jnp.concatenate([z, b.T], axis=1)], axis=0)

    def fuse_gates(mats):                # 3 x (2H,2H) -> (2H, 3*gate_stride), 128-lane blocks
        pad = jnp.zeros((H2, gate_stride - H2), jnp.float32)
        return jnp.concatenate([jnp.concatenate([m, pad], axis=1) for m in mats], axis=1)

    wih_l1, whh_l1, bih_l1, bhh_l1 = params["gru_l_1"]
    wih_r1, whh_r1, bih_r1, bhh_r1 = params["gru_r_1"]
    wih_l2, whh_l2, bih_l2, bhh_l2 = params["gru_l_2"]
    wih_r2, whh_r2, bih_r2, bhh_r2 = params["gru_r_2"]
    W_fc, b_fc = params["fc"]

    vecs = []
    for g in range(3):                   # layer-1 input weights (Din=1 column vectors)
        vecs.append(cat_vec(gate(wih_l1, g)[:, 0], gate(wih_r1, g)[:, 0]))
    vecs.append(cat_vec(gate(bih_l1, 0) + gate(bhh_l1, 0), gate(bih_r1, 0) + gate(bhh_r1, 0)))
    vecs.append(cat_vec(gate(bih_l1, 1) + gate(bhh_l1, 1), gate(bih_r1, 1) + gate(bhh_r1, 1)))
    vecs.append(cat_vec(gate(bih_l1, 2), gate(bih_r1, 2)))
    vecs.append(cat_vec(gate(bhh_l1, 2), gate(bhh_r1, 2)))
    vecs.append(cat_vec(gate(bih_l2, 0) + gate(bhh_l2, 0), gate(bih_r2, 0) + gate(bhh_r2, 0)))
    vecs.append(cat_vec(gate(bih_l2, 1) + gate(bhh_l2, 1), gate(bih_r2, 1) + gate(bhh_r2, 1)))
    vecs.append(cat_vec(gate(bih_l2, 2), gate(bih_r2, 2)))
    vecs.append(cat_vec(gate(bhh_l2, 2), gate(bhh_r2, 2)))
    vec = jnp.concatenate(vecs, axis=0).astype(jnp.float32)           # (11, 2H)

    # layer-1 W_hh^T and layer-2 W_ih^T, block-diag [left|right], gates fused into lane blocks.
    # Stored bf16: these only feed the MXU (preferred_element_type stays f32 in-kernel).
    mat1 = fuse_gates([block_diag_T(gate(whh_l1, g), gate(whh_r1, g)) for g in range(3)]
                      ).astype(jnp.bfloat16)                          # (2H, 3*gate_stride)
    mat2 = fuse_gates([block_diag_T(gate(wih_l2, g), gate(wih_r2, g)) for g in range(3)]
                      ).astype(jnp.bfloat16)                          # (2H, 3*gate_stride)

    wfc = W_fc.T.astype(jnp.bfloat16)                                 # (2H, C)
    bfc = b_fc[None, :].astype(jnp.float32)                           # (1, C)
    return vec, mat1, mat2, wfc, bfc


def my_gru_forward(x, y, packed, *, hidden, num_classes):
    """x: (B, Tx) f32, y: (B, Ty) f32 -> (B, num_classes) softmax probs. Single launch.

    Note: the biggest throughput lever is batching more rows per call (per-call latency is
    essentially flat up to B~8 sublanes / B~128+ MXU rows); on v7x a parallel batch grid axis
    would additionally split work across the two TensorCores once B grows.  At B=2 neither
    applies, so the kernel stays grid-less.
    """
    vec, mat1, mat2, wfc, bfc = packed
    B, Tx = x.shape
    _, Ty = y.shape
    gate_stride = mat1.shape[1] // 3
    kernel = functools.partial(_mygru_fused_kernel, hidden=hidden, t_x=Tx, t_y=Ty,
                               gate_stride=gate_stride)
    return pl.pallas_call(
        kernel,
        out_shape=jax.ShapeDtypeStruct((B, num_classes), jnp.float32),
        in_specs=[pl.BlockSpec(memory_space=pltpu.MemorySpace.VMEM)] * 7,
        out_specs=pl.BlockSpec(memory_space=pltpu.MemorySpace.VMEM),
    )(x, y, vec, mat1, mat2, wfc, bfc)


# -----------------------------------------------------------------------------
# Deterministic parameter init (same shapes / init range as torch.nn.GRU/Linear)
# -----------------------------------------------------------------------------
def _init_gru(key, input_size, hidden):
    stdv = 1.0 / math.sqrt(hidden)
    k = jax.random.split(key, 4)
    wih = jax.random.uniform(k[0], (3 * hidden, input_size), jnp.float32, -stdv, stdv)
    whh = jax.random.uniform(k[1], (3 * hidden, hidden), jnp.float32, -stdv, stdv)
    bih = jax.random.uniform(k[2], (3 * hidden,), jnp.float32, -stdv, stdv)
    bhh = jax.random.uniform(k[3], (3 * hidden,), jnp.float32, -stdv, stdv)
    return (wih, whh, bih, bhh)


def init_params(key, hidden, num_classes):
    ks = jax.random.split(key, 6)
    stdv = 1.0 / math.sqrt(2 * hidden)
    return {
        "gru_l_1": _init_gru(ks[0], 1, hidden),
        "gru_l_2": _init_gru(ks[1], hidden, hidden),
        "gru_r_1": _init_gru(ks[2], 1, hidden),
        "gru_r_2": _init_gru(ks[3], hidden, hidden),
        "fc": (jax.random.uniform(ks[4], (num_classes, 2 * hidden), jnp.float32, -stdv, stdv),
               jax.random.uniform(ks[5], (num_classes,), jnp.float32, -stdv, stdv)),
    }


# -----------------------------------------------------------------------------
# Pure-JAX f32 reference (for an in-script correctness check)
# -----------------------------------------------------------------------------
def _gru_ref(x_btd, gru_params):
    wih, whh, bih, bhh = gru_params
    B, T, _ = x_btd.shape
    H = whh.shape[1]
    h = jnp.zeros((B, H), jnp.float32)
    for t in range(T):
        x_t = x_btd[:, t, :]
        gi = x_t @ wih.T + bih
        gh = h @ whh.T + bhh
        r = jax.nn.sigmoid(gi[:, :H] + gh[:, :H])
        z = jax.nn.sigmoid(gi[:, H:2 * H] + gh[:, H:2 * H])
        n = jnp.tanh(gi[:, 2 * H:] + r * gh[:, 2 * H:])
        h = (1 - z) * n + z * h
    return h


def _forward_ref(x, y, params):
    xn = x / jnp.maximum(jnp.sqrt(jnp.sum(x * x, axis=1, keepdims=True)), 1e-12)
    hx1 = _gru_ref(xn[:, :, None], params["gru_l_1"])
    hx2 = _gru_ref(hx1[:, None, :], params["gru_l_2"])
    hy1 = _gru_ref(y[:, :, None], params["gru_r_1"])
    hy2 = _gru_ref(hy1[:, None, :], params["gru_r_2"])
    W_fc, b_fc = params["fc"]
    logits = jnp.concatenate([hx2, hy2], axis=-1) @ W_fc.T + b_fc
    return jax.nn.softmax(logits, axis=-1)


# -----------------------------------------------------------------------------
if __name__ == "__main__":
    key = jax.random.PRNGKey(0)
    B, metricSize, seq_y = 2, 8, 8
    hidden, num_classes = 32, 4

    kx, ky, kp = jax.random.split(key, 3)
    x = jax.random.normal(kx, (B, metricSize), jnp.float32)
    y = jax.random.normal(ky, (B, seq_y), jnp.float32)
    params = init_params(kp, hidden, num_classes)
    packed = jax.tree_util.tree_map(jax.block_until_ready,
                                    pack_params(params, hidden))   # pack once, not per call

    out = my_gru_forward(x, y, packed, hidden=hidden, num_classes=num_classes)
    out = jax.block_until_ready(out)

    ref = _forward_ref(x, y, params)
    assert out.shape == (B, num_classes)
    # Tolerance relaxed from 1e-4 (pure f32) to 2e-2 because matmul operands now feed the MXU
    # as bf16 (per perf review); all accumulation and elementwise math remain f32, and observed
    # error on the softmax outputs is O(1e-3).
    assert jnp.allclose(out, ref, atol=2e-2, rtol=2e-2), "Pallas output mismatch vs reference"

    print("KERNEL_OK")
</pallas_src>

<mosaic_0001>
module attributes {stable_mosaic.version = 11 : i64} {
  func.func @_mygru_fused_kernel(%arg0: memref<2x8xf32, #tpu.memory_space<vmem>>, %arg1: memref<2x8xf32, #tpu.memory_space<vmem>>, %arg2: memref<11x64xf32, #tpu.memory_space<vmem>>, %arg3: memref<64x384xbf16, #tpu.memory_space<vmem>>, %arg4: memref<64x384xbf16, #tpu.memory_space<vmem>>, %arg5: memref<64x4xbf16, #tpu.memory_space<vmem>>, %arg6: memref<1x4xf32, #tpu.memory_space<vmem>>, %arg7: memref<2x4xf32, #tpu.memory_space<vmem>>) attributes {dimension_semantics = [], scalar_prefetch = 0 : i64, scratch_operands = 0 : i64, tpu.core_type = #tpu.core_type<tc>} {
    %c0 = arith.constant 0 : index
    %c0_0 = arith.constant 0 : index
    %0 = vector.load %arg2[%c0, %c0_0] : memref<11x64xf32, #tpu.memory_space<vmem>>, vector<1x64xf32>
    %c1 = arith.constant 1 : index
    %c0_1 = arith.constant 0 : index
    %1 = vector.load %arg2[%c1, %c0_1] : memref<11x64xf32, #tpu.memory_space<vmem>>, vector<1x64xf32>
    %c2 = arith.constant 2 : index
    %c0_2 = arith.constant 0 : index
    %2 = vector.load %arg2[%c2, %c0_2] : memref<11x64xf32, #tpu.memory_space<vmem>>, vector<1x64xf32>
    %c3 = arith.constant 3 : index
    %c0_3 = arith.constant 0 : index
    %3 = vector.load %arg2[%c3, %c0_3] : memref<11x64xf32, #tpu.memory_space<vmem>>, vector<1x64xf32>
    %c4 = arith.constant 4 : index
    %c0_4 = arith.constant 0 : index
    %4 = vector.load %arg2[%c4, %c0_4] : memref<11x64xf32, #tpu.memory_space<vmem>>, vector<1x64xf32>
    %c5 = arith.constant 5 : index
    %c0_5 = arith.constant 0 : index
    %5 = vector.load %arg2[%c5, %c0_5] : memref<11x64xf32, #tpu.memory_space<vmem>>, vector<1x64xf32>
    %c6 = arith.constant 6 : index
    %c0_6 = arith.constant 0 : index
    %6 = vector.load %arg2[%c6, %c0_6] : memref<11x64xf32, #tpu.memory_space<vmem>>, vector<1x64xf32>
    %c0_7 = arith.constant 0 : index
    %c0_8 = arith.constant 0 : index
    %7 = vector.load %arg3[%c0_7, %c0_8] : memref<64x384xbf16, #tpu.memory_space<vmem>>, vector<64x384xbf16>
    %c0_9 = arith.constant 0 : index
    %c0_10 = arith.constant 0 : index
    %8 = vector.load %arg0[%c0_9, %c0_10] : memref<2x8xf32, #tpu.memory_space<vmem>>, vector<2x8xf32>
    %c0_11 = arith.constant 0 : index
    %c0_12 = arith.constant 0 : index
    %9 = vector.load %arg1[%c0_11, %c0_12] : memref<2x8xf32, #tpu.memory_space<vmem>>, vector<2x8xf32>
    %10 = arith.mulf %8, %8 : vector<2x8xf32>
    %cst = arith.constant dense<0.000000e+00> : vector<2xf32>
    %11 = vector.multi_reduction <add>, %10, %cst [1] : vector<2x8xf32> to vector<2xf32>
    %12 = vector.shape_cast %11 : vector<2xf32> to vector<2x1xf32>
    %13 = math.sqrt %12 : vector<2x1xf32>
    %cst_13 = arith.constant 9.99999996E-13 : f32
    %14 = vector.broadcast %cst_13 : f32 to vector<2x1xf32>
    %15 = arith.maximumf %13, %14 : vector<2x1xf32>
    %16 = vector.broadcast %15 : vector<2x1xf32> to vector<2x8xf32>
    %17 = arith.divf %8, %16 : vector<2x8xf32>
    %18 = tpu.iota {dimensions = array<i32: 1>} : vector<2x64xi32>
    %c32_i32 = arith.constant 32 : i32
    %19 = vector.broadcast %c32_i32 : i32 to vector<2x64xi32>
    %20 = arith.cmpi slt, %18, %19 : vector<2x64xi32>
    %cst_14 = arith.constant 0.000000e+00 : f32
    %21 = vector.broadcast %cst_14 : f32 to vector<2x64xf32>
    %22 = vector.extract_strided_slice %17 {offsets = [0, 0], sizes = [2, 1], strides = [1, 1]} : vector<2x8xf32> to vector<2x1xf32>
    %23 = vector.extract_strided_slice %9 {offsets = [0, 0], sizes = [2, 1], strides = [1, 1]} : vector<2x8xf32> to vector<2x1xf32>
    %24 = vector.shape_cast %22 : vector<2x1xf32> to vector<2x1xf32>
    %25 = vector.broadcast %24 : vector<2x1xf32> to vector<2x64xf32>
    %26 = vector.shape_cast %23 : vector<2x1xf32> to vector<2x1xf32>
    %27 = vector.broadcast %26 : vector<2x1xf32> to vector<2x64xf32>
    %28 = arith.select %20, %25, %27 : vector<2x64xi1>, vector<2x64xf32>
    %29 = vector.broadcast %0 : vector<1x64xf32> to vector<2x64xf32>
    %30 = arith.mulf %28, %29 : vector<2x64xf32>
    %31 = vector.broadcast %3 : vector<1x64xf32> to vector<2x64xf32>
    %32 = arith.addf %30, %31 : vector<2x64xf32>
    %33 = vector.broadcast %1 : vector<1x64xf32> to vector<2x64xf32>
    %34 = arith.mulf %28, %33 : vector<2x64xf32>
    %35 = vector.broadcast %4 : vector<1x64xf32> to vector<2x64xf32>
    %36 = arith.addf %34, %35 : vector<2x64xf32>
    %37 = vector.broadcast %2 : vector<1x64xf32> to vector<2x64xf32>
    %38 = arith.mulf %28, %37 : vector<2x64xf32>
    %39 = vector.broadcast %5 : vector<1x64xf32> to vector<2x64xf32>
    %40 = arith.addf %38, %39 : vector<2x64xf32>
    %41 = arith.truncf %21 : vector<2x64xf32> to vector<2x64xbf16>
    %cst_15 = arith.constant dense<0.000000e+00> : vector<2x384xf32>
    %42 = tpu.matmul %41, %7, %cst_15 {dimension_numbers = #tpu.dot_dimension_numbers<[1], [0], [0], [1], [0, 0, 1, 1], [], []>} : vector<2x64xbf16>, vector<64x384xbf16>, vector<2x384xf32> -> vector<2x384xf32>
    %43 = vector.extract_strided_slice %42 {offsets = [0, 0], sizes = [2, 64], strides = [1, 1]} : vector<2x384xf32> to vector<2x64xf32>
    %44 = arith.addf %32, %43 : vector<2x64xf32>
    %45 = arith.negf %44 : vector<2x64xf32>
    %46 = math.exp %45 : vector<2x64xf32>
    %cst_16 = arith.constant 1.000000e+00 : f32
    %47 = vector.broadcast %cst_16 : f32 to vector<2x64xf32>
    %48 = arith.addf %47, %46 : vector<2x64xf32>
    %49 = arith.divf %47, %48 : vector<2x64xf32>
    %50 = vector.extract_strided_slice %42 {offsets = [0, 128], sizes = [2, 64], strides = [1, 1]} : vector<2x384xf32> to vector<2x64xf32>
    %51 = arith.addf %36, %50 : vector<2x64xf32>
    %52 = arith.negf %51 : vector<2x64xf32>
    %53 = math.exp %52 : vector<2x64xf32>
    %cst_17 = arith.constant 1.000000e+00 : f32
    %54 = vector.broadcast %cst_17 : f32 to vector<2x64xf32>
    %55 = arith.addf %54, %53 : vector<2x64xf32>
    %56 = arith.divf %54, %55 : vector<2x64xf32>
    %57 = vector.extract_strided_slice %42 {offsets = [0, 256], sizes = [2, 64], strides = [1, 1]} : vector<2x384xf32> to vector<2x64xf32>
    %58 = vector.broadcast %6 : vector<1x64xf32> to vector<2x64xf32>
    %59 = arith.addf %57, %58 : vector<2x64xf32>
    %60 = arith.mulf %49, %59 : vector<2x64xf32>
    %61 = arith.addf %40, %60 : vector<2x64xf32>
    %62 = math.tanh %61 : vector<2x64xf32>
    %cst_18 = arith.constant 1.000000e+00 : f32
    %63 = vector.broadcast %cst_18 : f32 to vector<2x64xf32>
    %64 = arith.subf %63, %56 : vector<2x64xf32>
    %65 = arith.mulf %64, %62 : vector<2x64xf32>
    %66 = arith.mulf %56, %21 : vector<2x64xf32>
    %67 = arith.addf %65, %66 : vector<2x64xf32>
    %68 = vector.extract_strided_slice %17 {offsets = [0, 1], sizes = [2, 1], strides = [1, 1]} : vector<2x8xf32> to vector<2x1xf32>
    %69 = vector.extract_strided_slice %9 {offsets = [0, 1], sizes = [2, 1], strides = [1, 1]} : vector<2x8xf32> to vector<2x1xf32>
    %70 = vector.shape_cast %68 : vector<2x1xf32> to vector<2x1xf32>
    %71 = vector.broadcast %70 : vector<2x1xf32> to vector<2x64xf32>
    %72 = vector.shape_cast %69 : vector<2x1xf32> to vector<2x1xf32>
    %73 = vector.broadcast %72 : vector<2x1xf32> to vector<2x64xf32>
    %74 = arith.select %20, %71, %73 : vector<2x64xi1>, vector<2x64xf32>
    %75 = vector.broadcast %0 : vector<1x64xf32> to vector<2x64xf32>
    %76 = arith.mulf %74, %75 : vector<2x64xf32>
    %77 = vector.broadcast %3 : vector<1x64xf32> to vector<2x64xf32>
    %78 = arith.addf %76, %77 : vector<2x64xf32>
    %79 = vector.broadcast %1 : vector<1x64xf32> to vector<2x64xf32>
    %80 = arith.mulf %74, %79 : vector<2x64xf32>
    %81 = vector.broadcast %4 : vector<1x64xf32> to vector<2x64xf32>
    %82 = arith.addf %80, %81 : vector<2x64xf32>
    %83 = vector.broadcast %2 : vector<1x64xf32> to vector<2x64xf32>
    %84 = arith.mulf %74, %83 : vector<2x64xf32>
    %85 = vector.broadcast %5 : vector<1x64xf32> to vector<2x64xf32>
    %86 = arith.addf %84, %85 : vector<2x64xf32>
    %87 = arith.truncf %67 : vector<2x64xf32> to vector<2x64xbf16>
    %cst_19 = arith.constant dense<0.000000e+00> : vector<2x384xf32>
    %88 = tpu.matmul %87, %7, %cst_19 {dimension_numbers = #tpu.dot_dimension_numbers<[1], [0], [0], [1], [0, 0, 1, 1], [], []>} : vector<2x64xbf16>, vector<64x384xbf16>, vector<2x384xf32> -> vector<2x384xf32>
    %89 = vector.extract_strided_slice %88 {offsets = [0, 0], sizes = [2, 64], strides = [1, 1]} : vector<2x384xf32> to vector<2x64xf32>
    %90 = arith.addf %78, %89 : vector<2x64xf32>
    %91 = arith.negf %90 : vector<2x64xf32>
    %92 = math.exp %91 : vector<2x64xf32>
    %cst_20 = arith.constant 1.000000e+00 : f32
    %93 = vector.broadcast %cst_20 : f32 to vector<2x64xf32>
    %94 = arith.addf %93, %92 : vector<2x64xf32>
    %95 = arith.divf %93, %94 : vector<2x64xf32>
    %96 = vector.extract_strided_slice %88 {offsets = [0, 128], sizes = [2, 64], strides = [1, 1]} : vector<2x384xf32> to vector<2x64xf32>
    %97 = arith.addf %82, %96 : vector<2x64xf32>
    %98 = arith.negf %97 : vector<2x64xf32>
    %99 = math.exp %98 : vector<2x64xf32>
    %cst_21 = arith.constant 1.000000e+00 : f32
    %100 = vector.broadcast %cst_21 : f32 to vector<2x64xf32>
    %101 = arith.addf %100, %99 : vector<2x64xf32>
    %102 = arith.divf %100, %101 : vector<2x64xf32>
    %103 = vector.extract_strided_slice %88 {offsets = [0, 256], sizes = [2, 64], strides = [1, 1]} : vector<2x384xf32> to vector<2x64xf32>
    %104 = vector.broadcast %6 : vector<1x64xf32> to vector<2x64xf32>
    %105 = arith.addf %103, %104 : vector<2x64xf32>
    %106 = arith.mulf %95, %105 : vector<2x64xf32>
    %107 = arith.addf %86, %106 : vector<2x64xf32>
    %108 = math.tanh %107 : vector<2x64xf32>
    %cst_22 = arith.constant 1.000000e+00 : f32
    %109 = vector.broadcast %cst_22 : f32 to vector<2x64xf32>
    %110 = arith.subf %109, %102 : vector<2x64xf32>
    %111 = arith.mulf %110, %108 : vector<2x64xf32>
    %112 = arith.mulf %102, %67 : vector<2x64xf32>
    %113 = arith.addf %111, %112 : vector<2x64xf32>
    %114 = vector.extract_strided_slice %17 {offsets = [0, 2], sizes = [2, 1], strides = [1, 1]} : vector<2x8xf32> to vector<2x1xf32>
    %115 = vector.extract_strided_slice %9 {offsets = [0, 2], sizes = [2, 1], strides = [1, 1]} : vector<2x8xf32> to vector<2x1xf32>
    %116 = vector.shape_cast %114 : vector<2x1xf32> to vector<2x1xf32>
    %117 = vector.broadcast %116 : vector<2x1xf32> to vector<2x64xf32>
    %118 = vector.shape_cast %115 : vector<2x1xf32> to vector<2x1xf32>
    %119 = vector.broadcast %118 : vector<2x1xf32> to vector<2x64xf32>
    %120 = arith.select %20, %117, %119 : vector<2x64xi1>, vector<2x64xf32>
    %121 = vector.broadcast %0 : vector<1x64xf32> to vector<2x64xf32>
    %122 = arith.mulf %120, %121 : vector<2x64xf32>
    %123 = vector.broadcast %3 : vector<1x64xf32> to vector<2x64xf32>
    %124 = arith.addf %122, %123 : vector<2x64xf32>
    %125 = vector.broadcast %1 : vector<1x64xf32> to vector<2x64xf32>
    %126 = arith.mulf %120, %125 : vector<2x64xf32>
    %127 = vector.broadcast %4 : vector<1x64xf32> to vector<2x64xf32>
    %128 = arith.addf %126, %127 : vector<2x64xf32>
    %129 = vector.broadcast %2 : vector<1x64xf32> to vector<2x64xf32>
    %130 = arith.mulf %120, %129 : vector<2x64xf32>
    %131 = vector.broadcast %5 : vector<1x64xf32> to vector<2x64xf32>
    %132 = arith.addf %130, %131 : vector<2x64xf32>
    %133 = arith.truncf %113 : vector<2x64xf32> to vector<2x64xbf16>
    %cst_23 = arith.constant dense<0.000000e+00> : vector<2x384xf32>
    %134 = tpu.matmul %133, %7, %cst_23 {dimension_numbers = #tpu.dot_dimension_numbers<[1], [0], [0], [1], [0, 0, 1, 1], [], []>} : vector<2x64xbf16>, vector<64x384xbf16>, vector<2x384xf32> -> vector<2x384xf32>
    %135 = vector.extract_strided_slice %134 {offsets = [0, 0], sizes = [2, 64], strides = [1, 1]} : vector<2x384xf32> to vector<2x64xf32>
    %136 = arith.addf %124, %135 : vector<2x64xf32>
    %137 = arith.negf %136 : vector<2x64xf32>
    %138 = math.exp %137 : vector<2x64xf32>
    %cst_24 = arith.constant 1.000000e+00 : f32
    %139 = vector.broadcast %cst_24 : f32 to vector<2x64xf32>
    %140 = arith.addf %139, %138 : vector<2x64xf32>
    %141 = arith.divf %139, %140 : vector<2x64xf32>
    %142 = vector.extract_strided_slice %134 {offsets = [0, 128], sizes = [2, 64], strides = [1, 1]} : vector<2x384xf32> to vector<2x64xf32>
    %143 = arith.addf %128, %142 : vector<2x64xf32>
    %144 = arith.negf %143 : vector<2x64xf32>
    %145 = math.exp %144 : vector<2x64xf32>
    %cst_25 = arith.constant 1.000000e+00 : f32
    %146 = vector.broadcast %cst_25 : f32 to vector<2x64xf32>
    %147 = arith.addf %146, %145 : vector<2x64xf32>
    %148 = arith.divf %146, %147 : vector<2x64xf32>
    %149 = vector.extract_strided_slice %134 {offsets = [0, 256], sizes = [2, 64], strides = [1, 1]} : vector<2x384xf32> to vector<2x64xf32>
    %150 = vector.broadcast %6 : vector<1x64xf32> to vector<2x64xf32>
    %151 = arith.addf %149, %150 : vector<2x64xf32>
    %152 = arith.mulf %141, %151 : vector<2x64xf32>
    %153 = arith.addf %132, %152 : vector<2x64xf32>
    %154 = math.tanh %153 : vector<2x64xf32>
    %cst_26 = arith.constant 1.000000e+00 : f32
    %155 = vector.broadcast %cst_26 : f32 to vector<2x64xf32>
    %156 = arith.subf %155, %148 : vector<2x64xf32>
    %157 = arith.mulf %156, %154 : vector<2x64xf32>
    %158 = arith.mulf %148, %113 : vector<2x64xf32>
    %159 = arith.addf %157, %158 : vector<2x64xf32>
    %160 = vector.extract_strided_slice %17 {offsets = [0, 3], sizes = [2, 1], strides = [1, 1]} : vector<2x8xf32> to vector<2x1xf32>
    %161 = vector.extract_strided_slice %9 {offsets = [0, 3], sizes = [2, 1], strides = [1, 1]} : vector<2x8xf32> to vector<2x1xf32>
    %162 = vector.shape_cast %160 : vector<2x1xf32> to vector<2x1xf32>
    %163 = vector.broadcast %162 : vector<2x1xf32> to vector<2x64xf32>
    %164 = vector.shape_cast %161 : vector<2x1xf32> to vector<2x1xf32>
    %165 = vector.broadcast %164 : vector<2x1xf32> to vector<2x64xf32>
    %166 = arith.select %20, %163, %165 : vector<2x64xi1>, vector<2x64xf32>
    %167 = vector.broadcast %0 : vector<1x64xf32> to vector<2x64xf32>
    %168 = arith.mulf %166, %167 : vector<2x64xf32>
    %169 = vector.broadcast %3 : vector<1x64xf32> to vector<2x64xf32>
    %170 = arith.addf %168, %169 : vector<2x64xf32>
    %171 = vector.broadcast %1 : vector<1x64xf32> to vector<2x64xf32>
    %172 = arith.mulf %166, %171 : vector<2x64xf32>
    %173 = vector.broadcast %4 : vector<1x64xf32> to vector<2x64xf32>
    %174 = arith.addf %172, %173 : vector<2x64xf32>
    %175 = vector.broadcast %2 : vector<1x64xf32> to vector<2x64xf32>
    %176 = arith.mulf %166, %175 : vector<2x64xf32>
    %177 = vector.broadcast %5 : vector<1x64xf32> to vector<2x64xf32>
    %178 = arith.addf %176, %177 : vector<2x64xf32>
    %179 = arith.truncf %159 : vector<2x64xf32> to vector<2x64xbf16>
    %cst_27 = arith.constant dense<0.000000e+00> : vector<2x384xf32>
    %180 = tpu.matmul %179, %7, %cst_27 {dimension_numbers = #tpu.dot_dimension_numbers<[1], [0], [0], [1], [0, 0, 1, 1], [], []>} : vector<2x64xbf16>, vector<64x384xbf16>, vector<2x384xf32> -> vector<2x384xf32>
    %181 = vector.extract_strided_slice %180 {offsets = [0, 0], sizes = [2, 64], strides = [1, 1]} : vector<2x384xf32> to vector<2x64xf32>
    %182 = arith.addf %170, %181 : vector<2x64xf32>
    %183 = arith.negf %182 : vector<2x64xf32>
    %184 = math.exp %183 : vector<2x64xf32>
    %cst_28 = arith.constant 1.000000e+00 : f32
    %185 = vector.broadcast %cst_28 : f32 to vector<2x64xf32>
    %186 = arith.addf %185, %184 : vector<2x64xf32>
    %187 = arith.divf %185, %186 : vector<2x64xf32>
    %188 = vector.extract_strided_slice %180 {offsets = [0, 128], sizes = [2, 64], strides = [1, 1]} : vector<2x384xf32> to vector<2x64xf32>
    %189 = arith.addf %174, %188 : vector<2x64xf32>
    %190 = arith.negf %189 : vector<2x64xf32>
    %191 = math.exp %190 : vector<2x64xf32>
    %cst_29 = arith.constant 1.000000e+00 : f32
    %192 = vector.broadcast %cst_29 : f32 to vector<2x64xf32>
    %193 = arith.addf %192, %191 : vector<2x64xf32>
    %194 = arith.divf %192, %193 : vector<2x64xf32>
    %195 = vector.extract_strided_slice %180 {offsets = [0, 256], sizes = [2, 64], strides = [1, 1]} : vector<2x384xf32> to vector<2x64xf32>
    %196 = vector.broadcast %6 : vector<1x64xf32> to vector<2x64xf32>
    %197 = arith.addf %195, %196 : vector<2x64xf32>
    %198 = arith.mulf %187, %197 : vector<2x64xf32>
    %199 = arith.addf %178, %198 : vector<2x64xf32>
    %200 = math.tanh %199 : vector<2x64xf32>
    %cst_30 = arith.constant 1.000000e+00 : f32
    %201 = vector.broadcast %cst_30 : f32 to vector<2x64xf32>
    %202 = arith.subf %201, %194 : vector<2x64xf32>
    %203 = arith.mulf %202, %200 : vector<2x64xf32>
    %204 = arith.mulf %194, %159 : vector<2x64xf32>
    %205 = arith.addf %203, %204 : vector<2x64xf32>
    %206 = vector.extract_strided_slice %17 {offsets = [0, 4], sizes = [2, 1], strides = [1, 1]} : vector<2x8xf32> to vector<2x1xf32>
    %207 = vector.extract_strided_slice %9 {offsets = [0, 4], sizes = [2, 1], strides = [1, 1]} : vector<2x8xf32> to vector<2x1xf32>
    %208 = vector.shape_cast %206 : vector<2x1xf32> to vector<2x1xf32>
    %209 = vector.broadcast %208 : vector<2x1xf32> to vector<2x64xf32>
    %210 = vector.shape_cast %207 : vector<2x1xf32> to vector<2x1xf32>
    %211 = vector.broadcast %210 : vector<2x1xf32> to vector<2x64xf32>
    %212 = arith.select %20, %209, %211 : vector<2x64xi1>, vector<2x64xf32>
    %213 = vector.broadcast %0 : vector<1x64xf32> to vector<2x64xf32>
    %214 = arith.mulf %212, %213 : vector<2x64xf32>
    %215 = vector.broadcast %3 : vector<1x64xf32> to vector<2x64xf32>
    %216 = arith.addf %214, %215 : vector<2x64xf32>
    %217 = vector.broadcast %1 : vector<1x64xf32> to vector<2x64xf32>
    %218 = arith.mulf %212, %217 : vector<2x64xf32>
    %219 = vector.broadcast %4 : vector<1x64xf32> to vector<2x64xf32>
    %220 = arith.addf %218, %219 : vector<2x64xf32>
    %221 = vector.broadcast %2 : vector<1x64xf32> to vector<2x64xf32>
    %222 = arith.mulf %212, %221 : vector<2x64xf32>
    %223 = vector.broadcast %5 : vector<1x64xf32> to vector<2x64xf32>
    %224 = arith.addf %222, %223 : vector<2x64xf32>
    %225 = arith.truncf %205 : vector<2x64xf32> to vector<2x64xbf16>
    %cst_31 = arith.constant dense<0.000000e+00> : vector<2x384xf32>
    %226 = tpu.matmul %225, %7, %cst_31 {dimension_numbers = #tpu.dot_dimension_numbers<[1], [0], [0], [1], [0, 0, 1, 1], [], []>} : vector<2x64xbf16>, vector<64x384xbf16>, vector<2x384xf32> -> vector<2x384xf32>
    %227 = vector.extract_strided_slice %226 {offsets = [0, 0], sizes = [2, 64], strides = [1, 1]} : vector<2x384xf32> to vector<2x64xf32>
    %228 = arith.addf %216, %227 : vector<2x64xf32>
    %229 = arith.negf %228 : vector<2x64xf32>
    %230 = math.exp %229 : vector<2x64xf32>
    %cst_32 = arith.constant 1.000000e+00 : f32
    %231 = vector.broadcast %cst_32 : f32 to vector<2x64xf32>
    %232 = arith.addf %231, %230 : vector<2x64xf32>
    %233 = arith.divf %231, %232 : vector<2x64xf32>
    %234 = vector.extract_strided_slice %226 {offsets = [0, 128], sizes = [2, 64], strides = [1, 1]} : vector<2x384xf32> to vector<2x64xf32>
    %235 = arith.addf %220, %234 : vector<2x64xf32>
    %236 = arith.negf %235 : vector<2x64xf32>
    %237 = math.exp %236 : vector<2x64xf32>
    %cst_33 = arith.constant 1.000000e+00 : f32
    %238 = vector.broadcast %cst_33 : f32 to vector<2x64xf32>
    %239 = arith.addf %238, %237 : vector<2x64xf32>
    %240 = arith.divf %238, %239 : vector<2x64xf32>
    %241 = vector.extract_strided_slice %226 {offsets = [0, 256], sizes = [2, 64], strides = [1, 1]} : vector<2x384xf32> to vector<2x64xf32>
    %242 = vector.broadcast %6 : vector<1x64xf32> to vector<2x64xf32>
    %243 = arith.addf %241, %242 : vector<2x64xf32>
    %244 = arith.mulf %233, %243 : vector<2x64xf32>
    %245 = arith.addf %224, %244 : vector<2x64xf32>
    %246 = math.tanh %245 : vector<2x64xf32>
    %cst_34 = arith.constant 1.000000e+00 : f32
    %247 = vector.broadcast %cst_34 : f32 to vector<2x64xf32>
    %248 = arith.subf %247, %240 : vector<2x64xf32>
    %249 = arith.mulf %248, %246 : vector<2x64xf32>
    %250 = arith.mulf %240, %205 : vector<2x64xf32>
    %251 = arith.addf %249, %250 : vector<2x64xf32>
    %252 = vector.extract_strided_slice %17 {offsets = [0, 5], sizes = [2, 1], strides = [1, 1]} : vector<2x8xf32> to vector<2x1xf32>
    %253 = vector.extract_strided_slice %9 {offsets = [0, 5], sizes = [2, 1], strides = [1, 1]} : vector<2x8xf32> to vector<2x1xf32>
    %254 = vector.shape_cast %252 : vector<2x1xf32> to vector<2x1xf32>
    %255 = vector.broadcast %254 : vector<2x1xf32> to vector<2x64xf32>
    %256 = vector.shape_cast %253 : vector<2x1xf32> to vector<2x1xf32>
    %257 = vector.broadcast %256 : vector<2x1xf32> to vector<2x64xf32>
    %258 = arith.select %20, %255, %257 : vector<2x64xi1>, vector<2x64xf32>
    %259 = vector.broadcast %0 : vector<1x64xf32> to vector<2x64xf32>
    %260 = arith.mulf %258, %259 : vector<2x64xf32>
    %261 = vector.broadcast %3 : vector<1x64xf32> to vector<2x64xf32>
    %262 = arith.addf %260, %261 : vector<2x64xf32>
    %263 = vector.broadcast %1 : vector<1x64xf32> to vector<2x64xf32>
    %264 = arith.mulf %258, %263 : vector<2x64xf32>
    %265 = vector.broadcast %4 : vector<1x64xf32> to vector<2x64xf32>
    %266 = arith.addf %264, %265 : vector<2x64xf32>
    %267 = vector.broadcast %2 : vector<1x64xf32> to vector<2x64xf32>
    %268 = arith.mulf %258, %267 : vector<2x64xf32>
    %269 = vector.broadcast %5 : vector<1x64xf32> to vector<2x64xf32>
    %270 = arith.addf %268, %269 : vector<2x64xf32>
    %271 = arith.truncf %251 : vector<2x64xf32> to vector<2x64xbf16>
    %cst_35 = arith.constant dense<0.000000e+00> : vector<2x384xf32>
    %272 = tpu.matmul %271, %7, %cst_35 {dimension_numbers = #tpu.dot_dimension_numbers<[1], [0], [0], [1], [0, 0, 1, 1], [], []>} : vector<2x64xbf16>, vector<64x384xbf16>, vector<2x384xf32> -> vector<2x384xf32>
    %273 = vector.extract_strided_slice %272 {offsets = [0, 0], sizes = [2, 64], strides = [1, 1]} : vector<2x384xf32> to vector<2x64xf32>
    %274 = arith.addf %262, %273 : vector<2x64xf32>
    %275 = arith.negf %274 : vector<2x64xf32>
    %276 = math.exp %275 : vector<2x64xf32>
    %cst_36 = arith.constant 1.000000e+00 : f32
    %277 = vector.broadcast %cst_36 : f32 to vector<2x64xf32>
    %278 = arith.addf %277, %276 : vector<2x64xf32>
    %279 = arith.divf %277, %278 : vector<2x64xf32>
    %280 = vector.extract_strided_slice %272 {offsets = [0, 128], sizes = [2, 64], strides = [1, 1]} : vector<2x384xf32> to vector<2x64xf32>
    %281 = arith.addf %266, %280 : vector<2x64xf32>
    %282 = arith.negf %281 : vector<2x64xf32>
    %283 = math.exp %282 : vector<2x64xf32>
    %cst_37 = arith.constant 1.000000e+00 : f32
    %284 = vector.broadcast %cst_37 : f32 to vector<2x64xf32>
    %285 = arith.addf %284, %283 : vector<2x64xf32>
    %286 = arith.divf %284, %285 : vector<2x64xf32>
    %287 = vector.extract_strided_slice %272 {offsets = [0, 256], sizes = [2, 64], strides = [1, 1]} : vector<2x384xf32> to vector<2x64xf32>
    %288 = vector.broadcast %6 : vector<1x64xf32> to vector<2x64xf32>
    %289 = arith.addf %287, %288 : vector<2x64xf32>
    %290 = arith.mulf %279, %289 : vector<2x64xf32>
    %291 = arith.addf %270, %290 : vector<2x64xf32>
    %292 = math.tanh %291 : vector<2x64xf32>
    %cst_38 = arith.constant 1.000000e+00 : f32
    %293 = vector.broadcast %cst_38 : f32 to vector<2x64xf32>
    %294 = arith.subf %293, %286 : vector<2x64xf32>
    %295 = arith.mulf %294, %292 : vector<2x64xf32>
    %296 = arith.mulf %286, %251 : vector<2x64xf32>
    %297 = arith.addf %295, %296 : vector<2x64xf32>
    %298 = vector.extract_strided_slice %17 {offsets = [0, 6], sizes = [2, 1], strides = [1, 1]} : vector<2x8xf32> to vector<2x1xf32>
    %299 = vector.extract_strided_slice %9 {offsets = [0, 6], sizes = [2, 1], strides = [1, 1]} : vector<2x8xf32> to vector<2x1xf32>
    %300 = vector.shape_cast %298 : vector<2x1xf32> to vector<2x1xf32>
    %301 = vector.broadcast %300 : vector<2x1xf32> to vector<2x64xf32>
    %302 = vector.shape_cast %299 : vector<2x1xf32> to vector<2x1xf32>
    %303 = vector.broadcast %302 : vector<2x1xf32> to vector<2x64xf32>
    %304 = arith.select %20, %301, %303 : vector<2x64xi1>, vector<2x64xf32>
    %305 = vector.broadcast %0 : vector<1x64xf32> to vector<2x64xf32>
    %306 = arith.mulf %304, %305 : vector<2x64xf32>
    %307 = vector.broadcast %3 : vector<1x64xf32> to vector<2x64xf32>
    %308 = arith.addf %306, %307 : vector<2x64xf32>
    %309 = vector.broadcast %1 : vector<1x64xf32> to vector<2x64xf32>
    %310 = arith.mulf %304, %309 : vector<2x64xf32>
    %311 = vector.broadcast %4 : vector<1x64xf32> to vector<2x64xf32>
    %312 = arith.addf %310, %311 : vector<2x64xf32>
    %313 = vector.broadcast %2 : vector<1x64xf32> to vector<2x64xf32>
    %314 = arith.mulf %304, %313 : vector<2x64xf32>
    %315 = vector.broadcast %5 : vector<1x64xf32> to vector<2x64xf32>
    %316 = arith.addf %314, %315 : vector<2x64xf32>
    %317 = arith.truncf %297 : vector<2x64xf32> to vector<2x64xbf16>
    %cst_39 = arith.constant dense<0.000000e+00> : vector<2x384xf32>
    %318 = tpu.matmul %317, %7, %cst_39 {dimension_numbers = #tpu.dot_dimension_numbers<[1], [0], [0], [1], [0, 0, 1, 1], [], []>} : vector<2x64xbf16>, vector<64x384xbf16>, vector<2x384xf32> -> vector<2x384xf32>
    %319 = vector.extract_strided_slice %318 {offsets = [0, 0], sizes = [2, 64], strides = [1, 1]} : vector<2x384xf32> to vector<2x64xf32>
    %320 = arith.addf %308, %319 : vector<2x64xf32>
    %321 = arith.negf %320 : vector<2x64xf32>
    %322 = math.exp %321 : vector<2x64xf32>
    %cst_40 = arith.constant 1.000000e+00 : f32
    %323 = vector.broadcast %cst_40 : f32 to vector<2x64xf32>
    %324 = arith.addf %323, %322 : vector<2x64xf32>
    %325 = arith.divf %323, %324 : vector<2x64xf32>
    %326 = vector.extract_strided_slice %318 {offsets = [0, 128], sizes = [2, 64], strides = [1, 1]} : vector<2x384xf32> to vector<2x64xf32>
    %327 = arith.addf %312, %326 : vector<2x64xf32>
    %328 = arith.negf %327 : vector<2x64xf32>
    %329 = math.exp %328 : vector<2x64xf32>
    %cst_41 = arith.constant 1.000000e+00 : f32
    %330 = vector.broadcast %cst_41 : f32 to vector<2x64xf32>
    %331 = arith.addf %330, %329 : vector<2x64xf32>
    %332 = arith.divf %330, %331 : vector<2x64xf32>
    %333 = vector.extract_strided_slice %318 {offsets = [0, 256], sizes = [2, 64], strides = [1, 1]} : vector<2x384xf32> to vector<2x64xf32>
    %334 = vector.broadcast %6 : vector<1x64xf32> to vector<2x64xf32>
    %335 = arith.addf %333, %334 : vector<2x64xf32>
    %336 = arith.mulf %325, %335 : vector<2x64xf32>
    %337 = arith.addf %316, %336 : vector<2x64xf32>
    %338 = math.tanh %337 : vector<2x64xf32>
    %cst_42 = arith.constant 1.000000e+00 : f32
    %339 = vector.broadcast %cst_42 : f32 to vector<2x64xf32>
    %340 = arith.subf %339, %332 : vector<2x64xf32>
    %341 = arith.mulf %340, %338 : vector<2x64xf32>
    %342 = arith.mulf %332, %297 : vector<2x64xf32>
    %343 = arith.addf %341, %342 : vector<2x64xf32>
    %344 = vector.extract_strided_slice %17 {offsets = [0, 7], sizes = [2, 1], strides = [1, 1]} : vector<2x8xf32> to vector<2x1xf32>
    %345 = vector.extract_strided_slice %9 {offsets = [0, 7], sizes = [2, 1], strides = [1, 1]} : vector<2x8xf32> to vector<2x1xf32>
    %346 = vector.shape_cast %344 : vector<2x1xf32> to vector<2x1xf32>
    %347 = vector.broadcast %346 : vector<2x1xf32> to vector<2x64xf32>
    %348 = vector.shape_cast %345 : vector<2x1xf32> to vector<2x1xf32>
    %349 = vector.broadcast %348 : vector<2x1xf32> to vector<2x64xf32>
    %350 = arith.select %20, %347, %349 : vector<2x64xi1>, vector<2x64xf32>
    %351 = vector.broadcast %0 : vector<1x64xf32> to vector<2x64xf32>
    %352 = arith.mulf %350, %351 : vector<2x64xf32>
    %353 = vector.broadcast %3 : vector<1x64xf32> to vector<2x64xf32>
    %354 = arith.addf %352, %353 : vector<2x64xf32>
    %355 = vector.broadcast %1 : vector<1x64xf32> to vector<2x64xf32>
    %356 = arith.mulf %350, %355 : vector<2x64xf32>
    %357 = vector.broadcast %4 : vector<1x64xf32> to vector<2x64xf32>
    %358 = arith.addf %356, %357 : vector<2x64xf32>
    %359 = vector.broadcast %2 : vector<1x64xf32> to vector<2x64xf32>
    %360 = arith.mulf %350, %359 : vector<2x64xf32>
    %361 = vector.broadcast %5 : vector<1x64xf32> to vector<2x64xf32>
    %362 = arith.addf %360, %361 : vector<2x64xf32>
    %363 = arith.truncf %343 : vector<2x64xf32> to vector<2x64xbf16>
    %cst_43 = arith.constant dense<0.000000e+00> : vector<2x384xf32>
    %364 = tpu.matmul %363, %7, %cst_43 {dimension_numbers = #tpu.dot_dimension_numbers<[1], [0], [0], [1], [0, 0, 1, 1], [], []>} : vector<2x64xbf16>, vector<64x384xbf16>, vector<2x384xf32> -> vector<2x384xf32>
    %365 = vector.extract_strided_slice %364 {offsets = [0, 0], sizes = [2, 64], strides = [1, 1]} : vector<2x384xf32> to vector<2x64xf32>
    %366 = arith.addf %354, %365 : vector<2x64xf32>
    %367 = arith.negf %366 : vector<2x64xf32>
    %368 = math.exp %367 : vector<2x64xf32>
    %cst_44 = arith.constant 1.000000e+00 : f32
    %369 = vector.broadcast %cst_44 : f32 to vector<2x64xf32>
    %370 = arith.addf %369, %368 : vector<2x64xf32>
    %371 = arith.divf %369, %370 : vector<2x64xf32>
    %372 = vector.extract_strided_slice %364 {offsets = [0, 128], sizes = [2, 64], strides = [1, 1]} : vector<2x384xf32> to vector<2x64xf32>
    %373 = arith.addf %358, %372 : vector<2x64xf32>
    %374 = arith.negf %373 : vector<2x64xf32>
    %375 = math.exp %374 : vector<2x64xf32>
    %cst_45 = arith.constant 1.000000e+00 : f32
    %376 = vector.broadcast %cst_45 : f32 to vector<2x64xf32>
    %377 = arith.addf %376, %375 : vector<2x64xf32>
    %378 = arith.divf %376, %377 : vector<2x64xf32>
    %379 = vector.extract_strided_slice %364 {offsets = [0, 256], sizes = [2, 64], strides = [1, 1]} : vector<2x384xf32> to vector<2x64xf32>
    %380 = vector.broadcast %6 : vector<1x64xf32> to vector<2x64xf32>
    %381 = arith.addf %379, %380 : vector<2x64xf32>
    %382 = arith.mulf %371, %381 : vector<2x64xf32>
    %383 = arith.addf %362, %382 : vector<2x64xf32>
    %384 = math.tanh %383 : vector<2x64xf32>
    %cst_46 = arith.constant 1.000000e+00 : f32
    %385 = vector.broadcast %cst_46 : f32 to vector<2x64xf32>
    %386 = arith.subf %385, %378 : vector<2x64xf32>
    %387 = arith.mulf %386, %384 : vector<2x64xf32>
    %388 = arith.mulf %378, %343 : vector<2x64xf32>
    %389 = arith.addf %387, %388 : vector<2x64xf32>
    %c7 = arith.constant 7 : index
    %c0_47 = arith.constant 0 : index
    %390 = vector.load %arg2[%c7, %c0_47] : memref<11x64xf32, #tpu.memory_space<vmem>>, vector<1x64xf32>
    %c8 = arith.constant 8 : index
    %c0_48 = arith.constant 0 : index
    %391 = vector.load %arg2[%c8, %c0_48] : memref<11x64xf32, #tpu.memory_space<vmem>>, vector<1x64xf32>
    %c9 = arith.constant 9 : index
    %c0_49 = arith.constant 0 : index
    %392 = vector.load %arg2[%c9, %c0_49] : memref<11x64xf32, #tpu.memory_space<vmem>>, vector<1x64xf32>
    %c10 = arith.constant 10 : index
    %c0_50 = arith.constant 0 : index
    %393 = vector.load %arg2[%c10, %c0_50] : memref<11x64xf32, #tpu.memory_space<vmem>>, vector<1x64xf32>
    %394 = arith.truncf %389 : vector<2x64xf32> to vector<2x64xbf16>
    %c0_51 = arith.constant 0 : index
    %c0_52 = arith.constant 0 : index
    %395 = vector.load %arg4[%c0_51, %c0_52] : memref<64x384xbf16, #tpu.memory_space<vmem>>, vector<64x384xbf16>
    %cst_53 = arith.constant dense<0.000000e+00> : vector<2x384xf32>
    %396 = tpu.matmul %394, %395, %cst_53 {dimension_numbers = #tpu.dot_dimension_numbers<[1], [0], [0], [1], [0, 0, 1, 1], [], []>} : vector<2x64xbf16>, vector<64x384xbf16>, vector<2x384xf32> -> vector<2x384xf32>
    %397 = vector.extract_strided_slice %396 {offsets = [0, 0], sizes = [2, 64], strides = [1, 1]} : vector<2x384xf32> to vector<2x64xf32>
    %398 = vector.broadcast %390 : vector<1x64xf32> to vector<2x64xf32>
    %399 = arith.addf %397, %398 : vector<2x64xf32>
    %400 = arith.negf %399 : vector<2x64xf32>
    %401 = math.exp %400 : vector<2x64xf32>
    %cst_54 = arith.constant 1.000000e+00 : f32
    %402 = vector.broadcast %cst_54 : f32 to vector<2x64xf32>
    %403 = arith.addf %402, %401 : vector<2x64xf32>
    %404 = arith.divf %402, %403 : vector<2x64xf32>
    %405 = vector.extract_strided_slice %396 {offsets = [0, 128], sizes = [2, 64], strides = [1, 1]} : vector<2x384xf32> to vector<2x64xf32>
    %406 = vector.broadcast %391 : vector<1x64xf32> to vector<2x64xf32>
    %407 = arith.addf %405, %406 : vector<2x64xf32>
    %408 = arith.negf %407 : vector<2x64xf32>
    %409 = math.exp %408 : vector<2x64xf32>
    %cst_55 = arith.constant 1.000000e+00 : f32
    %410 = vector.broadcast %cst_55 : f32 to vector<2x64xf32>
    %411 = arith.addf %410, %409 : vector<2x64xf32>
    %412 = arith.divf %410, %411 : vector<2x64xf32>
    %413 = vector.extract_strided_slice %396 {offsets = [0, 256], sizes = [2, 64], strides = [1, 1]} : vector<2x384xf32> to vector<2x64xf32>
    %414 = vector.broadcast %392 : vector<1x64xf32> to vector<2x64xf32>
    %415 = arith.addf %413, %414 : vector<2x64xf32>
    %416 = vector.broadcast %393 : vector<1x64xf32> to vector<2x64xf32>
    %417 = arith.mulf %404, %416 : vector<2x64xf32>
    %418 = arith.addf %415, %417 : vector<2x64xf32>
    %419 = math.tanh %418 : vector<2x64xf32>
    %cst_56 = arith.constant 1.000000e+00 : f32
    %420 = vector.broadcast %cst_56 : f32 to vector<2x64xf32>
    %421 = arith.subf %420, %412 : vector<2x64xf32>
    %422 = arith.mulf %421, %419 : vector<2x64xf32>
    %423 = arith.truncf %422 : vector<2x64xf32> to vector<2x64xbf16>
    %c0_57 = arith.constant 0 : index
    %c0_58 = arith.constant 0 : index
    %424 = vector.load %arg5[%c0_57, %c0_58] : memref<64x4xbf16, #tpu.memory_space<vmem>>, vector<64x4xbf16>
    %cst_59 = arith.constant dense<0.000000e+00> : vector<2x4xf32>
    %425 = tpu.matmul %423, %424, %cst_59 {dimension_numbers = #tpu.dot_dimension_numbers<[1], [0], [0], [1], [0, 0, 1, 1], [], []>} : vector<2x64xbf16>, vector<64x4xbf16>, vector<2x4xf32> -> vector<2x4xf32>
    %c0_60 = arith.constant 0 : index
    %c0_61 = arith.constant 0 : index
    %426 = vector.load %arg6[%c0_60, %c0_61] : memref<1x4xf32, #tpu.memory_space<vmem>>, vector<1x4xf32>
    %427 = vector.broadcast %426 : vector<1x4xf32> to vector<2x4xf32>
    %428 = arith.addf %425, %427 : vector<2x4xf32>
    %cst_62 = arith.constant dense<0xFF800000> : vector<2xf32>
    %429 = vector.multi_reduction <maximumf>, %428, %cst_62 [1] : vector<2x4xf32> to vector<2xf32>
    %430 = vector.shape_cast %429 : vector<2xf32> to vector<2x1xf32>
    %431 = vector.broadcast %430 : vector<2x1xf32> to vector<2x4xf32>
    %432 = arith.subf %428, %431 : vector<2x4xf32>
    %433 = math.exp %432 : vector<2x4xf32>
    %cst_63 = arith.constant dense<0.000000e+00> : vector<2xf32>
    %434 = vector.multi_reduction <add>, %433, %cst_63 [1] : vector<2x4xf32> to vector<2xf32>
    %435 = vector.shape_cast %434 : vector<2xf32> to vector<2x1xf32>
    %436 = tpu.reciprocal %435 {approx = true} : vector<2x1xf32> -> vector<2x1xf32>
    %437 = vector.broadcast %436 : vector<2x1xf32> to vector<2x4xf32>
    %438 = arith.mulf %433, %437 : vector<2x4xf32>
    %c0_64 = arith.constant 0 : index
    %c0_65 = arith.constant 0 : index
    %439 = vector.load %arg7[%c0_64, %c0_65] : memref<2x4xf32, #tpu.memory_space<vmem>>, vector<2x4xf32>
    tpu.vector_store %arg7[%c0_64, %c0_65], %438 {strides = array<i32>} : memref<2x4xf32, #tpu.memory_space<vmem>>, vector<2x4xf32>,
    return
  }
}

</mosaic_0001>

<llo_original>
// kernel: tpu_custom_call.1
$region0: #{tpu_custom_call.1}
  #allocation0 [shape = 'u32[]', space=smem, size = 0x4, offset = 0x4, fixed_abs, tag = 'smem constant byte address 0x4 - core index']
  #allocation1 [shape = 'u32[72,128]{1,0:T(1,128)}', space=vmem, size = 0x9000, scoped, tag = 'internal scratch']
  %s0 = inlined_call_operand.vmem [shape: f32[2,8], index: 0, kind: input, shape index: {}]
  %s1 = inlined_call_operand.vmem [shape: f32[2,8], index: 1, kind: input, shape index: {}]
  %s2 = inlined_call_operand.vmem [shape: f32[11,64], index: 2, kind: input, shape index: {}]
  %s3 = inlined_call_operand.hbm [shape: bf16[64,384], index: 3, kind: input, shape index: {}]
  %s4 = inlined_call_operand.hbm [shape: bf16[64,384], index: 4, kind: input, shape index: {}]
  %s5 = inlined_call_operand.vmem [shape: bf16[64,4], index: 5, kind: input, shape index: {}]
  %s6 = inlined_call_operand.vmem [shape: f32[1,4], index: 6, kind: input, shape index: {}]
  %s7 = inlined_call_operand.hbm [shape: f32[2,4], index: 7, kind: output, shape index: {}]
  %s8 = sld [smem:[#allocation0]]
  $region46: #{tpu_custom_call.1} parent=0
    _
  %s10 = ssub.s32 1, %s8
  %s11 = scalar_select 0, %s10, %s8
  $region1: #{tpu_custom_call.1} parent=0
    #allocation2 [shape = 'u8[49152]{0}', space=vmem, size = 0xc000, scoped, tag = 'input window, operand 3, single buffered']
    #allocation3 [shape = 's32[1]{0}', space=sflag, size = 0x4, scoped, tag = 'scoped memory for tpu_custom_call.1']
    #allocation4 [shape = 's32[1]{0}', space=sflag, size = 0x4, scoped, tag = 'scoped memory for tpu_custom_call.1']
    #allocation5 [shape = 'u8[49152]{0}', space=vmem, size = 0xc000, scoped, tag = 'input window, operand 4, single buffered']
    #allocation6 [shape = 's32[1]{0}', space=sflag, size = 0x4, scoped, tag = 'scoped memory for tpu_custom_call.1']
    #allocation7 [shape = 'u8[1024]{0}', space=vmem, size = 0x400, scoped, tag = 'output window, operand 0, single buffered']
    %12 = vsyncpa [#allocation3], 0
    %13 = vsyncpa [#allocation6], 0
    %14 = vsyncpa [#allocation4], 0
    // Predicated region
    $region2: #{tpu_custom_call.1} parent=1 // pred_check
      _
    $region3: #{tpu_custom_call.1} parent=1 // pred_check_branch
      %16 = sbr.rel (0) target = $region5
    $region4: #{tpu_custom_call.1} parent=1 // pred_region
      _
    $region5: #{tpu_custom_call.1} parent=1 // pred_fallthru
      _
    // Predicated region
    $region6: #{tpu_custom_call.1} parent=1 // pred_check
      _
    $region7: #{tpu_custom_call.1} parent=1 // pred_check_branch
      %18 = sbr.rel (0) target = $region9
    $region8: #{tpu_custom_call.1} parent=1 // pred_region
      _
    $region9: #{tpu_custom_call.1} parent=1 // pred_fallthru
      _
    // Predicated region
    $region10: #{tpu_custom_call.1} parent=1 // pred_check
      _
    $region11: #{tpu_custom_call.1} parent=1 // pred_check_branch
      %20 = sbr.rel (0) target = $region13
    $region12: #{tpu_custom_call.1} parent=1 // pred_region
      _
    $region13: #{tpu_custom_call.1} parent=1 // pred_fallthru
      _
    // Predicated region
    $region14: #{tpu_custom_call.1} parent=1 // pred_check
      _
    $region15: #{tpu_custom_call.1} parent=1 // pred_check_branch
      %22 = sbr.rel (0) target = $region17
    $region16: #{tpu_custom_call.1} parent=1 // pred_region
      %24 = vsyncadd [#allocation3], 0
      %s25 = sshll.u32 %s3, 4
      %s26 = int_to_ptr.hbm [resolvable:$true] %s25
      %s27 = sshll.u32 [#allocation2], 4
      %s28 = int_to_ptr.vmem [resolvable:$true] %s27
      %33 = dma.hbm_to_vmem [thread:$0]  %s26, 1536, %s28, [#allocation3], 192, 192, 12
    $region17: #{tpu_custom_call.1} parent=1 // pred_fallthru
      _
    // Predicated region
    $region18: #{tpu_custom_call.1} parent=1 // pred_check
      _
    $region19: #{tpu_custom_call.1} parent=1 // pred_check_branch
      %35 = sbr.rel (0) target = $region21
    $region20: #{tpu_custom_call.1} parent=1 // pred_region
      %37 = vsyncadd [#allocation6], 0
      %s38 = sshll.u32 %s4, 4
      %s39 = int_to_ptr.hbm [resolvable:$true] %s38
      %s40 = sshll.u32 [#allocation5], 4
      %s41 = int_to_ptr.vmem [resolvable:$true] %s40
      %46 = dma.hbm_to_vmem [thread:$0]  %s39, 1536, %s41, [#allocation6], 192, 192, 12
    $region21: #{tpu_custom_call.1} parent=1 // pred_fallthru
      _
    // Predicated region
    $region22: #{tpu_custom_call.1} parent=1 // pred_check
      _
    $region23: #{tpu_custom_call.1} parent=1 // pred_check_branch
      %48 = sbr.rel (0) target = $region25
    $region24: #{tpu_custom_call.1} parent=1 // pred_region
      _
    $region25: #{tpu_custom_call.1} parent=1 // pred_fallthru
      _
    // Predicated region
    $region26: #{tpu_custom_call.1} parent=1 // pred_check
      _
    $region27: #{tpu_custom_call.1} parent=1 // pred_check_branch
      %50 = sbr.rel (0) target = $region29
    $region28: #{tpu_custom_call.1} parent=1 // pred_region
      _
    $region29: #{tpu_custom_call.1} parent=1 // pred_fallthru
      _
    // Predicated region
    $region30: #{tpu_custom_call.1} parent=1 // pred_check
      _
    $region31: #{tpu_custom_call.1} parent=1 // pred_check_branch
      %52 = sbr.rel (0) target = $region33
    $region32: #{tpu_custom_call.1} parent=1 // pred_region
      %54 = dma.done [#allocation3], 1536
    $region33: #{tpu_custom_call.1} parent=1 // pred_fallthru
      _
    // Predicated region
    $region34: #{tpu_custom_call.1} parent=1 // pred_check
      _
    $region35: #{tpu_custom_call.1} parent=1 // pred_check_branch
      %56 = sbr.rel (0) target = $region37
    $region36: #{tpu_custom_call.1} parent=1 // pred_region
      %58 = dma.done [#allocation6], 1536
    $region37: #{tpu_custom_call.1} parent=1 // pred_fallthru
      _
    %v60 = vld [vmem:[%s2] sm:$0x1]
    %v61 = vld [vmem:[%s2 + $0x1] sm:$0x1]
    %v62 = vld [vmem:[%s2 + $0x2] sm:$0x1]
    %v63 = vld [vmem:[%s2 + $0x3] sm:$0x1]
    %v64 = vld [vmem:[%s2 + $0x4] sm:$0x1]
    %v65 = vld [vmem:[%s2 + $0x5] sm:$0x1]
    %v66 = vld [vmem:[%s2 + $0x6] sm:$0x1]
    %v67 = vld [vmem:[#allocation2] sm:$0xff]
    %v68 = vld [vmem:[#allocation2 + $0x8] sm:$0xf]
    %v69 = vld [vmem:[#allocation2 + $0xc] sm:$0xff]
    %v70 = vld [vmem:[#allocation2 + $0x14] sm:$0xf]
    %v71 = vld [vmem:[#allocation2 + $0x18] sm:$0xff]
    %v72 = vld [vmem:[#allocation2 + $0x20] sm:$0xf]
    %v73 = vld [vmem:[#allocation2 + $0x24] sm:$0xff]
    %v74 = vld [vmem:[#allocation2 + $0x2c] sm:$0xf]
    %v75 = vld [vmem:[#allocation2 + $0x30] sm:$0xff]
    %v76 = vld [vmem:[#allocation2 + $0x38] sm:$0xf]
    %v77 = vld [vmem:[#allocation2 + $0x3c] sm:$0xff]
    %v78 = vld [vmem:[#allocation2 + $0x44] sm:$0xf]
    %v79 = vld [vmem:[#allocation2 + $0x48] sm:$0xff]
    %v80 = vld [vmem:[#allocation2 + $0x50] sm:$0xf]
    %v81 = vld [vmem:[#allocation2 + $0x54] sm:$0xff]
    %v82 = vld [vmem:[#allocation2 + $0x5c] sm:$0xf]
    %v83 = vld [vmem:[%s0] sm:$0x3]
    %v84 = vld [vmem:[%s1] sm:$0x3]
    %v85 = vmul.f32 %v83, %v83
    %vm86 = vcmask 58368
    %v87 = vsel %vm86, %v85, 0.0
    %88 = vadd.xlane.f32.xlu0 %v87
    %v89 = vpop.xlane.xlu0 %88
    %v90 = vrsqrt.pop %v89
    %v91 = vmul.f32 %v90, %v89
    %v92 = vmul.f32 %v91, %v90
    %v93 = vmul.f32 0.5, %v92
    %v94 = vsub.f32 1.5, %v93
    %v95 = vmul.f32 %v90, %v94
    %v96 = vmul.f32 %v89, %v95
    %vm97 = vcmp.eq.f32.partialorder %v89, inf
    %v98 = vsel %vm97, %v89, %v96
    %vm99 = vcmp.eq.f32.partialorder %v89, 0.0
    %v100 = vand.u32 %v89, 2147483648
    %v101 = vsel %vm99, %v100, %v98
    %v102 = vmax.f32 %v101, 1e-12
    %v103 = vrcp.pop %v102
    %v104 = vmul.f32 %v102, %v103
    %v105 = vsub.f32 1.0, %v104
    %v106 = vmul.f32 %v103, %v105
    %v107 = vadd.f32 %v103, %v106
    %vm108 = vweird.f32 %v102
    %vm109 = vweird.f32 %v103
    %vm110 = vmor %vm108, %vm109
    %v111 = vsel %vm110, %v103, %v107
    %v112 = vand.u32 2147483647, %v102
    %vm113 = vcmp.eq.f32.partialorder %v112, 8.507059e+37
    %v114 = vand.u32 %v102, 2147483648
    %v115 = vor.u32 1.1754944e-38, %v114
    %v116 = vsel %vm113, %v115, %v111
    %v117 = vmul.f32 %v83, %v116
    %v118 = vlaneseq
    %v119 = vand.u32 %v118, 127
    %vm120 = vcmp.lt.s32.totalorder %v119, 32
    %122 = vset.pattern.permute.xlu0 0
    %123 = vperm.xlu0 %122, %v117
    %v124 = vpop.permute.xlu0 %123
    %127 = vset.pattern.permute.xlu0 0
    %128 = vperm.xlu0 %127, %v84
    %v129 = vpop.permute.xlu0 %128
    %v131 = vsel %vm120, %v124, %v129
    %v132 = vperm.slane %v60, 0
    %v133 = vmul.f32 %v131, %v132
    %v134 = vperm.slane %v63, 0
    %v135 = vadd.f32 %v133, %v134
    %v136 = vperm.slane %v61, 0
    %v137 = vmul.f32 %v131, %v136
    %v138 = vperm.slane %v64, 0
    %v139 = vadd.f32 %v137, %v138
    %v140 = vperm.slane %v62, 0
    %v141 = vmul.f32 %v131, %v140
    %v142 = vperm.slane %v65, 0
    %v143 = vadd.f32 %v141, %v142
    %v160 = vunpack.c.l.b16 %v67
    %v161 = vunpack.c.h.b16 %v67
    %v162 = vunpack.c.l.b16 %v68
    %v163 = vunpack.c.l.b16 %v69
    %v164 = vunpack.c.h.b16 %v69
    %v165 = vunpack.c.l.b16 %v70
    %v166 = vunpack.c.l.b16 %v71
    %v167 = vunpack.c.h.b16 %v71
    %v168 = vunpack.c.l.b16 %v72
    %v169 = vunpack.c.l.b16 %v73
    %v170 = vunpack.c.h.b16 %v73
    %v171 = vunpack.c.l.b16 %v74
    %v172 = vunpack.c.l.b16 %v75
    %v173 = vunpack.c.h.b16 %v75
    %v174 = vunpack.c.l.b16 %v76
    %v175 = vunpack.c.l.b16 %v77
    %v176 = vunpack.c.h.b16 %v77
    %v177 = vunpack.c.l.b16 %v78
    %v178 = vunpack.c.l.b16 %v79
    %v179 = vunpack.c.h.b16 %v79
    %v180 = vunpack.c.l.b16 %v80
    %v181 = vunpack.c.l.b16 %v81
    %v182 = vunpack.c.h.b16 %v81
    %v183 = vunpack.c.l.b16 %v82
    %v184 = vpack.c.b16 %v163, %v160
    %v185 = vpack.c.b16 %v164, %v161
    %v186 = vpack.c.b16 %v165, %v162
    %v187 = vpack.c.b16 %v169, %v166
    %v188 = vpack.c.b16 %v170, %v167
    %v189 = vpack.c.b16 %v171, %v168
    %v190 = vpack.c.b16 %v175, %v172
    %v191 = vpack.c.b16 %v176, %v173
    %v192 = vpack.c.b16 %v177, %v174
    %v193 = vpack.c.b16 %v181, %v178
    %v194 = vpack.c.b16 %v182, %v179
    %v195 = vpack.c.b16 %v183, %v180
    %vm208 = vcmask 523264
    %v210 = vsel %vm208, 0, 0
    %212 = vmatpush.bf16.msra.mxu0 0
    %213 = vmatpush.bf16.msra.mxu0 0
    %214 = vmatpush.bf16.msra.mxu0 0
    %215 = vmatpush.bf16.msra.mxu0 0
    %216 = vmatpush.bf16.msra.mxu0 %v193
    %217 = vmatpush.bf16.msra.mxu0 %v190
    %218 = vmatpush.bf16.msra.mxu0 %v187
    %219 = vmatpush.bf16.msra.mxu0 %v184
    %220 = vmatmul.bf16.gmra.mxu0 %v210
    %v221 = vpop.f32.mrf.mxu0
    %v222 = vadd.f32 0.0, %v221
    %v223 = vpop.f32.mrf.mxu0
    %224 = vdwg.mxu0
    %225 = vmatpush.bf16.msra.mxu0 0
    %226 = vmatpush.bf16.msra.mxu0 0
    %227 = vmatpush.bf16.msra.mxu0 0
    %228 = vmatpush.bf16.msra.mxu0 0
    %229 = vmatpush.bf16.msra.mxu0 %v194
    %230 = vmatpush.bf16.msra.mxu0 %v191
    %231 = vmatpush.bf16.msra.mxu0 %v188
    %232 = vmatpush.bf16.msra.mxu0 %v185
    %233 = vmatmul.bf16.gmra.mxu0 %v210
    %v234 = vpop.f32.mrf.mxu0
    %v235 = vadd.f32 0.0, %v234
    %v236 = vpop.f32.mrf.mxu0
    %237 = vdwg.mxu0
    %238 = vmatpush.bf16.msra.mxu0 0
    %239 = vmatpush.bf16.msra.mxu0 0
    %240 = vmatpush.bf16.msra.mxu0 0
    %241 = vmatpush.bf16.msra.mxu0 0
    %242 = vmatpush.bf16.msra.mxu0 %v195
    %243 = vmatpush.bf16.msra.mxu0 %v192
    %244 = vmatpush.bf16.msra.mxu0 %v189
    %245 = vmatpush.bf16.msra.mxu0 %v186
    %246 = vmatmul.bf16.gmra.mxu0 %v210
    %v247 = vpop.f32.mrf.mxu0
    %v248 = vadd.f32 0.0, %v247
    %v249 = vpop.f32.mrf.mxu0
    %250 = vdwg.mxu0
    %v251 = vadd.f32 %v135, %v222
    %v252 = vxor.u32 %v251, 2147483648
    %v253 = vmul.f32 %v252, 1.442695
    %v254 = vpow.pop %v253
    %v255 = vadd.f32 %v254, 1.0
    %v256 = vrcp.pop %v255
    %v257 = vmul.f32 %v255, %v256
    %v258 = vsub.f32 1.0, %v257
    %v259 = vmul.f32 %v256, %v258
    %v260 = vadd.f32 %v256, %v259
    %vm261 = vweird.f32 %v255
    %vm262 = vweird.f32 %v256
    %vm263 = vmor %vm261, %vm262
    %v264 = vsel %vm263, %v256, %v260
    %v265 = vand.u32 2147483647, %v255
    %vm266 = vcmp.eq.f32.partialorder %v265, 8.507059e+37
    %v267 = vand.u32 %v255, 2147483648
    %v268 = vor.u32 1.1754944e-38, %v267
    %v269 = vsel %vm266, %v268, %v264
    %v270 = vmul.f32 1.0, %v269
    %v271 = vadd.f32 %v139, %v235
    %v272 = vxor.u32 %v271, 2147483648
    %v273 = vmul.f32 %v272, 1.442695
    %v274 = vpow.pop %v273
    %v275 = vadd.f32 %v274, 1.0
    %v276 = vrcp.pop %v275
    %v277 = vmul.f32 %v275, %v276
    %v278 = vsub.f32 1.0, %v277
    %v279 = vmul.f32 %v276, %v278
    %v280 = vadd.f32 %v276, %v279
    %vm281 = vweird.f32 %v275
    %vm282 = vweird.f32 %v276
    %vm283 = vmor %vm281, %vm282
    %v284 = vsel %vm283, %v276, %v280
    %v285 = vand.u32 2147483647, %v275
    %vm286 = vcmp.eq.f32.partialorder %v285, 8.507059e+37
    %v287 = vand.u32 %v275, 2147483648
    %v288 = vor.u32 1.1754944e-38, %v287
    %v289 = vsel %vm286, %v288, %v284
    %v290 = vmul.f32 1.0, %v289
    %v291 = vperm.slane %v66, 0
    %v292 = vadd.f32 %v248, %v291
    %v293 = vmul.f32 %v270, %v292
    %v294 = vadd.f32 %v143, %v293
    %v295 = vtanh.pop %v294
    %v296 = vsub.f32 1.0, %v290
    %v297 = vmul.f32 %v296, %v295
    %v298 = vmul.f32 %v290, 0.0
    %v299 = vadd.f32 %v297, %v298
    %300 = vset.pattern.permute.xlu0 1
    %301 = vperm.xlu0 %300, %v117
    %v302 = vpop.permute.xlu0 %301
    %304 = vset.pattern.permute.xlu0 1
    %305 = vperm.xlu0 %304, %v84
    %v306 = vpop.permute.xlu0 %305
    %v308 = vsel %vm120, %v302, %v306
    %v309 = vmul.f32 %v308, %v132
    %v310 = vadd.f32 %v309, %v134
    %v311 = vmul.f32 %v308, %v136
    %v312 = vadd.f32 %v311, %v138
    %v313 = vmul.f32 %v308, %v140
    %v314 = vadd.f32 %v313, %v142
    %v315 = vpack.c.bf16 %v299, %v299
    %v317 = vsel %vm208, %v315, 0
    %319 = vmatpush.bf16.msra.mxu0 0
    %320 = vmatpush.bf16.msra.mxu0 0
    %321 = vmatpush.bf16.msra.mxu0 0
    %322 = vmatpush.bf16.msra.mxu0 0
    %323 = vmatpush.bf16.msra.mxu0 %v193
    %324 = vmatpush.bf16.msra.mxu0 %v190
    %325 = vmatpush.bf16.msra.mxu0 %v187
    %326 = vmatpush.bf16.msra.mxu0 %v184
    %327 = vmatmul.bf16.gmra.mxu0 %v317
    %v328 = vpop.f32.mrf.mxu0
    %v329 = vadd.f32 0.0, %v328
    %v330 = vpop.f32.mrf.mxu0
    %331 = vdwg.mxu0
    %332 = vmatpush.bf16.msra.mxu0 0
    %333 = vmatpush.bf16.msra.mxu0 0
    %334 = vmatpush.bf16.msra.mxu0 0
    %335 = vmatpush.bf16.msra.mxu0 0
    %336 = vmatpush.bf16.msra.mxu0 %v194
    %337 = vmatpush.bf16.msra.mxu0 %v191
    %338 = vmatpush.bf16.msra.mxu0 %v188
    %339 = vmatpush.bf16.msra.mxu0 %v185
    %340 = vmatmul.bf16.gmra.mxu0 %v317
    %v341 = vpop.f32.mrf.mxu0
    %v342 = vadd.f32 0.0, %v341
    %v343 = vpop.f32.mrf.mxu0
    %344 = vdwg.mxu0
    %345 = vmatpush.bf16.msra.mxu0 0
    %346 = vmatpush.bf16.msra.mxu0 0
    %347 = vmatpush.bf16.msra.mxu0 0
    %348 = vmatpush.bf16.msra.mxu0 0
    %349 = vmatpush.bf16.msra.mxu0 %v195
    %350 = vmatpush.bf16.msra.mxu0 %v192
    %351 = vmatpush.bf16.msra.mxu0 %v189
    %352 = vmatpush.bf16.msra.mxu0 %v186
    %353 = vmatmul.bf16.gmra.mxu0 %v317
    %v354 = vpop.f32.mrf.mxu0
    %v355 = vadd.f32 0.0, %v354
    %v356 = vpop.f32.mrf.mxu0
    %357 = vdwg.mxu0
    %v358 = vadd.f32 %v310, %v329
    %v359 = vxor.u32 %v358, 2147483648
    %v360 = vmul.f32 %v359, 1.442695
    %v361 = vpow.pop %v360
    %v362 = vadd.f32 %v361, 1.0
    %v363 = vrcp.pop %v362
    %v364 = vmul.f32 %v362, %v363
    %v365 = vsub.f32 1.0, %v364
    %v366 = vmul.f32 %v363, %v365
    %v367 = vadd.f32 %v363, %v366
    %vm368 = vweird.f32 %v362
    %vm369 = vweird.f32 %v363
    %vm370 = vmor %vm368, %vm369
    %v371 = vsel %vm370, %v363, %v367
    %v372 = vand.u32 2147483647, %v362
    %vm373 = vcmp.eq.f32.partialorder %v372, 8.507059e+37
    %v374 = vand.u32 %v362, 2147483648
    %v375 = vor.u32 1.1754944e-38, %v374
    %v376 = vsel %vm373, %v375, %v371
    %v377 = vmul.f32 1.0, %v376
    %v378 = vadd.f32 %v312, %v342
    %v379 = vxor.u32 %v378, 2147483648
    %v380 = vmul.f32 %v379, 1.442695
    %v381 = vpow.pop %v380
    %v382 = vadd.f32 %v381, 1.0
    %v383 = vrcp.pop %v382
    %v384 = vmul.f32 %v382, %v383
    %v385 = vsub.f32 1.0, %v384
    %v386 = vmul.f32 %v383, %v385
    %v387 = vadd.f32 %v383, %v386
    %vm388 = vweird.f32 %v382
    %vm389 = vweird.f32 %v383
    %vm390 = vmor %vm388, %vm389
    %v391 = vsel %vm390, %v383, %v387
    %v392 = vand.u32 2147483647, %v382
    %vm393 = vcmp.eq.f32.partialorder %v392, 8.507059e+37
    %v394 = vand.u32 %v382, 2147483648
    %v395 = vor.u32 1.1754944e-38, %v394
    %v396 = vsel %vm393, %v395, %v391
    %v397 = vmul.f32 1.0, %v396
    %v398 = vadd.f32 %v355, %v291
    %v399 = vmul.f32 %v377, %v398
    %v400 = vadd.f32 %v314, %v399
    %v401 = vtanh.pop %v400
    %v402 = vsub.f32 1.0, %v397
    %v403 = vmul.f32 %v402, %v401
    %v404 = vmul.f32 %v397, %v299
    %v405 = vadd.f32 %v403, %v404
    %406 = vset.pattern.permute.xlu0 2
    %407 = vperm.xlu0 %406, %v117
    %v408 = vpop.permute.xlu0 %407
    %410 = vset.pattern.permute.xlu0 2
    %411 = vperm.xlu0 %410, %v84
    %v412 = vpop.permute.xlu0 %411
    %v414 = vsel %vm120, %v408, %v412
    %v415 = vmul.f32 %v414, %v132
    %v416 = vadd.f32 %v415, %v134
    %v417 = vmul.f32 %v414, %v136
    %v418 = vadd.f32 %v417, %v138
    %v419 = vmul.f32 %v414, %v140
    %v420 = vadd.f32 %v419, %v142
    %v421 = vpack.c.bf16 %v405, %v405
    %v423 = vsel %vm208, %v421, 0
    %425 = vmatpush.bf16.msra.mxu0 0
    %426 = vmatpush.bf16.msra.mxu0 0
    %427 = vmatpush.bf16.msra.mxu0 0
    %428 = vmatpush.bf16.msra.mxu0 0
    %429 = vmatpush.bf16.msra.mxu0 %v193
    %430 = vmatpush.bf16.msra.mxu0 %v190
    %431 = vmatpush.bf16.msra.mxu0 %v187
    %432 = vmatpush.bf16.msra.mxu0 %v184
    %433 = vmatmul.bf16.gmra.mxu0 %v423
    %v434 = vpop.f32.mrf.mxu0
    %v435 = vadd.f32 0.0, %v434
    %v436 = vpop.f32.mrf.mxu0
    %437 = vdwg.mxu0
    %438 = vmatpush.bf16.msra.mxu0 0
    %439 = vmatpush.bf16.msra.mxu0 0
    %440 = vmatpush.bf16.msra.mxu0 0
    %441 = vmatpush.bf16.msra.mxu0 0
    %442 = vmatpush.bf16.msra.mxu0 %v194
    %443 = vmatpush.bf16.msra.mxu0 %v191
    %444 = vmatpush.bf16.msra.mxu0 %v188
    %445 = vmatpush.bf16.msra.mxu0 %v185
    %446 = vmatmul.bf16.gmra.mxu0 %v423
    %v447 = vpop.f32.mrf.mxu0
    %v448 = vadd.f32 0.0, %v447
    %v449 = vpop.f32.mrf.mxu0
    %450 = vdwg.mxu0
    %451 = vmatpush.bf16.msra.mxu0 0
    %452 = vmatpush.bf16.msra.mxu0 0
    %453 = vmatpush.bf16.msra.mxu0 0
    %454 = vmatpush.bf16.msra.mxu0 0
    %455 = vmatpush.bf16.msra.mxu0 %v195
    %456 = vmatpush.bf16.msra.mxu0 %v192
    %457 = vmatpush.bf16.msra.mxu0 %v189
    %458 = vmatpush.bf16.msra.mxu0 %v186
    %459 = vmatmul.bf16.gmra.mxu0 %v423
    %v460 = vpop.f32.mrf.mxu0
    %v461 = vadd.f32 0.0, %v460
    %v462 = vpop.f32.mrf.mxu0
    %463 = vdwg.mxu0
    %v464 = vadd.f32 %v416, %v435
    %v465 = vxor.u32 %v464, 2147483648
    %v466 = vmul.f32 %v465, 1.442695
    %v467 = vpow.pop %v466
    %v468 = vadd.f32 %v467, 1.0
    %v469 = vrcp.pop %v468
    %v470 = vmul.f32 %v468, %v469
    %v471 = vsub.f32 1.0, %v470
    %v472 = vmul.f32 %v469, %v471
    %v473 = vadd.f32 %v469, %v472
    %vm474 = vweird.f32 %v468
    %vm475 = vweird.f32 %v469
    %vm476 = vmor %vm474, %vm475
    %v477 = vsel %vm476, %v469, %v473
    %v478 = vand.u32 2147483647, %v468
    %vm479 = vcmp.eq.f32.partialorder %v478, 8.507059e+37
    %v480 = vand.u32 %v468, 2147483648
    %v481 = vor.u32 1.1754944e-38, %v480
    %v482 = vsel %vm479, %v481, %v477
    %v483 = vmul.f32 1.0, %v482
    %v484 = vadd.f32 %v418, %v448
    %v485 = vxor.u32 %v484, 2147483648
    %v486 = vmul.f32 %v485, 1.442695
    %v487 = vpow.pop %v486
    %v488 = vadd.f32 %v487, 1.0
    %v489 = vrcp.pop %v488
    %v490 = vmul.f32 %v488, %v489
    %v491 = vsub.f32 1.0, %v490
    %v492 = vmul.f32 %v489, %v491
    %v493 = vadd.f32 %v489, %v492
    %vm494 = vweird.f32 %v488
    %vm495 = vweird.f32 %v489
    %vm496 = vmor %vm494, %vm495
    %v497 = vsel %vm496, %v489, %v493
    %v498 = vand.u32 2147483647, %v488
    %vm499 = vcmp.eq.f32.partialorder %v498, 8.507059e+37
    %v500 = vand.u32 %v488, 2147483648
    %v501 = vor.u32 1.1754944e-38, %v500
    %v502 = vsel %vm499, %v501, %v497
    %v503 = vmul.f32 1.0, %v502
    %v504 = vadd.f32 %v461, %v291
    %v505 = vmul.f32 %v483, %v504
    %v506 = vadd.f32 %v420, %v505
    %v507 = vtanh.pop %v506
    %v508 = vsub.f32 1.0, %v503
    %v509 = vmul.f32 %v508, %v507
    %v510 = vmul.f32 %v503, %v405
    %v511 = vadd.f32 %v509, %v510
    %512 = vset.pattern.permute.xlu0 3
    %513 = vperm.xlu0 %512, %v117
    %v514 = vpop.permute.xlu0 %513
    %516 = vset.pattern.permute.xlu0 3
    %517 = vperm.xlu0 %516, %v84
    %v518 = vpop.permute.xlu0 %517
    %v520 = vsel %vm120, %v514, %v518
    %v521 = vmul.f32 %v520, %v132
    %v522 = vadd.f32 %v521, %v134
    %v523 = vmul.f32 %v520, %v136
    %v524 = vadd.f32 %v523, %v138
    %v525 = vmul.f32 %v520, %v140
    %v526 = vadd.f32 %v525, %v142
    %v527 = vpack.c.bf16 %v511, %v511
    %v529 = vsel %vm208, %v527, 0
    %531 = vmatpush.bf16.msra.mxu0 0
    %532 = vmatpush.bf16.msra.mxu0 0
    %533 = vmatpush.bf16.msra.mxu0 0
    %534 = vmatpush.bf16.msra.mxu0 0
    %535 = vmatpush.bf16.msra.mxu0 %v193
    %536 = vmatpush.bf16.msra.mxu0 %v190
    %537 = vmatpush.bf16.msra.mxu0 %v187
    %538 = vmatpush.bf16.msra.mxu0 %v184
    %539 = vmatmul.bf16.gmra.mxu0 %v529
    %v540 = vpop.f32.mrf.mxu0
    %v541 = vadd.f32 0.0, %v540
    %v542 = vpop.f32.mrf.mxu0
    %543 = vdwg.mxu0
    %544 = vmatpush.bf16.msra.mxu0 0
    %545 = vmatpush.bf16.msra.mxu0 0
    %546 = vmatpush.bf16.msra.mxu0 0
    %547 = vmatpush.bf16.msra.mxu0 0
    %548 = vmatpush.bf16.msra.mxu0 %v194
    %549 = vmatpush.bf16.msra.mxu0 %v191
    %550 = vmatpush.bf16.msra.mxu0 %v188
    %551 = vmatpush.bf16.msra.mxu0 %v185
    %552 = vmatmul.bf16.gmra.mxu0 %v529
    %v553 = vpop.f32.mrf.mxu0
    %v554 = vadd.f32 0.0, %v553
    %v555 = vpop.f32.mrf.mxu0
    %556 = vdwg.mxu0
    %557 = vmatpush.bf16.msra.mxu0 0
    %558 = vmatpush.bf16.msra.mxu0 0
    %559 = vmatpush.bf16.msra.mxu0 0
    %560 = vmatpush.bf16.msra.mxu0 0
    %561 = vmatpush.bf16.msra.mxu0 %v195
    %562 = vmatpush.bf16.msra.mxu0 %v192
    %563 = vmatpush.bf16.msra.mxu0 %v189
    %564 = vmatpush.bf16.msra.mxu0 %v186
    %565 = vmatmul.bf16.gmra.mxu0 %v529
    %v566 = vpop.f32.mrf.mxu0
    %v567 = vadd.f32 0.0, %v566
    %v568 = vpop.f32.mrf.mxu0
    %569 = vdwg.mxu0
    %v570 = vadd.f32 %v522, %v541
    %v571 = vxor.u32 %v570, 2147483648
    %v572 = vmul.f32 %v571, 1.442695
    %v573 = vpow.pop %v572
    %v574 = vadd.f32 %v573, 1.0
    %v575 = vrcp.pop %v574
    %v576 = vmul.f32 %v574, %v575
    %v577 = vsub.f32 1.0, %v576
    %v578 = vmul.f32 %v575, %v577
    %v579 = vadd.f32 %v575, %v578
    %vm580 = vweird.f32 %v574
    %vm581 = vweird.f32 %v575
    %vm582 = vmor %vm580, %vm581
    %v583 = vsel %vm582, %v575, %v579
    %v584 = vand.u32 2147483647, %v574
    %vm585 = vcmp.eq.f32.partialorder %v584, 8.507059e+37
    %v586 = vand.u32 %v574, 2147483648
    %v587 = vor.u32 1.1754944e-38, %v586
    %v588 = vsel %vm585, %v587, %v583
    %v589 = vmul.f32 1.0, %v588
    %v590 = vadd.f32 %v524, %v554
    %v591 = vxor.u32 %v590, 2147483648
    %v592 = vmul.f32 %v591, 1.442695
    %v593 = vpow.pop %v592
    %v594 = vadd.f32 %v593, 1.0
    %v595 = vrcp.pop %v594
    %v596 = vmul.f32 %v594, %v595
    %v597 = vsub.f32 1.0, %v596
    %v598 = vmul.f32 %v595, %v597
    %v599 = vadd.f32 %v595, %v598
    %vm600 = vweird.f32 %v594
    %vm601 = vweird.f32 %v595
    %vm602 = vmor %vm600, %vm601
    %v603 = vsel %vm602, %v595, %v599
    %v604 = vand.u32 2147483647, %v594
    %vm605 = vcmp.eq.f32.partialorder %v604, 8.507059e+37
    %v606 = vand.u32 %v594, 2147483648
    %v607 = vor.u32 1.1754944e-38, %v606
    %v608 = vsel %vm605, %v607, %v603
    %v609 = vmul.f32 1.0, %v608
    %v610 = vadd.f32 %v567, %v291
    %v611 = vmul.f32 %v589, %v610
    %v612 = vadd.f32 %v526, %v611
    %v613 = vtanh.pop %v612
    %v614 = vsub.f32 1.0, %v609
    %v615 = vmul.f32 %v614, %v613
    %v616 = vmul.f32 %v609, %v511
    %v617 = vadd.f32 %v615, %v616
    %618 = vset.pattern.permute.xlu0 4
    %619 = vperm.xlu0 %618, %v117
    %v620 = vpop.permute.xlu0 %619
    %622 = vset.pattern.permute.xlu0 4
    %623 = vperm.xlu0 %622, %v84
    %v624 = vpop.permute.xlu0 %623
    %v626 = vsel %vm120, %v620, %v624
    %v627 = vmul.f32 %v626, %v132
    %v628 = vadd.f32 %v627, %v134
    %v629 = vmul.f32 %v626, %v136
    %v630 = vadd.f32 %v629, %v138
    %v631 = vmul.f32 %v626, %v140
    %v632 = vadd.f32 %v631, %v142
    %v633 = vpack.c.bf16 %v617, %v617
    %v635 = vsel %vm208, %v633, 0
    %637 = vmatpush.bf16.msra.mxu0 0
    %638 = vmatpush.bf16.msra.mxu0 0
    %639 = vmatpush.bf16.msra.mxu0 0
    %640 = vmatpush.bf16.msra.mxu0 0
    %641 = vmatpush.bf16.msra.mxu0 %v193
    %642 = vmatpush.bf16.msra.mxu0 %v190
    %643 = vmatpush.bf16.msra.mxu0 %v187
    %644 = vmatpush.bf16.msra.mxu0 %v184
    %645 = vmatmul.bf16.gmra.mxu0 %v635
    %v646 = vpop.f32.mrf.mxu0
    %v647 = vadd.f32 0.0, %v646
    %v648 = vpop.f32.mrf.mxu0
    %649 = vdwg.mxu0
    %650 = vmatpush.bf16.msra.mxu0 0
    %651 = vmatpush.bf16.msra.mxu0 0
    %652 = vmatpush.bf16.msra.mxu0 0
    %653 = vmatpush.bf16.msra.mxu0 0
    %654 = vmatpush.bf16.msra.mxu0 %v194
    %655 = vmatpush.bf16.msra.mxu0 %v191
    %656 = vmatpush.bf16.msra.mxu0 %v188
    %657 = vmatpush.bf16.msra.mxu0 %v185
    %658 = vmatmul.bf16.gmra.mxu0 %v635
    %v659 = vpop.f32.mrf.mxu0
    %v660 = vadd.f32 0.0, %v659
    %v661 = vpop.f32.mrf.mxu0
    %662 = vdwg.mxu0
    %663 = vmatpush.bf16.msra.mxu0 0
    %664 = vmatpush.bf16.msra.mxu0 0
    %665 = vmatpush.bf16.msra.mxu0 0
    %666 = vmatpush.bf16.msra.mxu0 0
    %667 = vmatpush.bf16.msra.mxu0 %v195
    %668 = vmatpush.bf16.msra.mxu0 %v192
    %669 = vmatpush.bf16.msra.mxu0 %v189
    %670 = vmatpush.bf16.msra.mxu0 %v186
    %671 = vmatmul.bf16.gmra.mxu0 %v635
    %v672 = vpop.f32.mrf.mxu0
    %v673 = vadd.f32 0.0, %v672
    %v674 = vpop.f32.mrf.mxu0
    %675 = vdwg.mxu0
    %v676 = vadd.f32 %v628, %v647
    %v677 = vxor.u32 %v676, 2147483648
    %v678 = vmul.f32 %v677, 1.442695
    %v679 = vpow.pop %v678
    %v680 = vadd.f32 %v679, 1.0
    %v681 = vrcp.pop %v680
    %v682 = vmul.f32 %v680, %v681
    %v683 = vsub.f32 1.0, %v682
    %v684 = vmul.f32 %v681, %v683
    %v685 = vadd.f32 %v681, %v684
    %vm686 = vweird.f32 %v680
    %vm687 = vweird.f32 %v681
    %vm688 = vmor %vm686, %vm687
    %v689 = vsel %vm688, %v681, %v685
    %v690 = vand.u32 2147483647, %v680
    %vm691 = vcmp.eq.f32.partialorder %v690, 8.507059e+37
    %v692 = vand.u32 %v680, 2147483648
    %v693 = vor.u32 1.1754944e-38, %v692
    %v694 = vsel %vm691, %v693, %v689
    %v695 = vmul.f32 1.0, %v694
    %v696 = vadd.f32 %v630, %v660
    %v697 = vxor.u32 %v696, 2147483648
    %v698 = vmul.f32 %v697, 1.442695
    %v699 = vpow.pop %v698
    %v700 = vadd.f32 %v699, 1.0
    %v701 = vrcp.pop %v700
    %v702 = vmul.f32 %v700, %v701
    %v703 = vsub.f32 1.0, %v702
    %v704 = vmul.f32 %v701, %v703
    %v705 = vadd.f32 %v701, %v704
    %vm706 = vweird.f32 %v700
    %vm707 = vweird.f32 %v701
    %vm708 = vmor %vm706, %vm707
    %v709 = vsel %vm708, %v701, %v705
    %v710 = vand.u32 2147483647, %v700
    %vm711 = vcmp.eq.f32.partialorder %v710, 8.507059e+37
    %v712 = vand.u32 %v700, 2147483648
    %v713 = vor.u32 1.1754944e-38, %v712
    %v714 = vsel %vm711, %v713, %v709
    %v715 = vmul.f32 1.0, %v714
    %v716 = vadd.f32 %v673, %v291
    %v717 = vmul.f32 %v695, %v716
    %v718 = vadd.f32 %v632, %v717
    %v719 = vtanh.pop %v718
    %v720 = vsub.f32 1.0, %v715
    %v721 = vmul.f32 %v720, %v719
    %v722 = vmul.f32 %v715, %v617
    %v723 = vadd.f32 %v721, %v722
    %724 = vset.pattern.permute.xlu0 5
    %725 = vperm.xlu0 %724, %v117
    %v726 = vpop.permute.xlu0 %725
    %728 = vset.pattern.permute.xlu0 5
    %729 = vperm.xlu0 %728, %v84
    %v730 = vpop.permute.xlu0 %729
    %v732 = vsel %vm120, %v726, %v730
    %v733 = vmul.f32 %v732, %v132
    %v734 = vadd.f32 %v733, %v134
    %v735 = vmul.f32 %v732, %v136
    %v736 = vadd.f32 %v735, %v138
    %v737 = vmul.f32 %v732, %v140
    %v738 = vadd.f32 %v737, %v142
    %v739 = vpack.c.bf16 %v723, %v723
    %v741 = vsel %vm208, %v739, 0
    %743 = vmatpush.bf16.msra.mxu0 0
    %744 = vmatpush.bf16.msra.mxu0 0
    %745 = vmatpush.bf16.msra.mxu0 0
    %746 = vmatpush.bf16.msra.mxu0 0
    %747 = vmatpush.bf16.msra.mxu0 %v193
    %748 = vmatpush.bf16.msra.mxu0 %v190
    %749 = vmatpush.bf16.msra.mxu0 %v187
    %750 = vmatpush.bf16.msra.mxu0 %v184
    %751 = vmatmul.bf16.gmra.mxu0 %v741
    %v752 = vpop.f32.mrf.mxu0
    %v753 = vadd.f32 0.0, %v752
    %v754 = vpop.f32.mrf.mxu0
    %755 = vdwg.mxu0
    %756 = vmatpush.bf16.msra.mxu0 0
    %757 = vmatpush.bf16.msra.mxu0 0
    %758 = vmatpush.bf16.msra.mxu0 0
    %759 = vmatpush.bf16.msra.mxu0 0
    %760 = vmatpush.bf16.msra.mxu0 %v194
    %761 = vmatpush.bf16.msra.mxu0 %v191
    %762 = vmatpush.bf16.msra.mxu0 %v188
    %763 = vmatpush.bf16.msra.mxu0 %v185
    %764 = vmatmul.bf16.gmra.mxu0 %v741
    %v765 = vpop.f32.mrf.mxu0
    %v766 = vadd.f32 0.0, %v765
    %v767 = vpop.f32.mrf.mxu0
    %768 = vdwg.mxu0
    %769 = vmatpush.bf16.msra.mxu0 0
    %770 = vmatpush.bf16.msra.mxu0 0
    %771 = vmatpush.bf16.msra.mxu0 0
    %772 = vmatpush.bf16.msra.mxu0 0
    %773 = vmatpush.bf16.msra.mxu0 %v195
    %774 = vmatpush.bf16.msra.mxu0 %v192
    %775 = vmatpush.bf16.msra.mxu0 %v189
    %776 = vmatpush.bf16.msra.mxu0 %v186
    %777 = vmatmul.bf16.gmra.mxu0 %v741
    %v778 = vpop.f32.mrf.mxu0
    %v779 = vadd.f32 0.0, %v778
    %v780 = vpop.f32.mrf.mxu0
    %781 = vdwg.mxu0
    %v782 = vadd.f32 %v734, %v753
    %v783 = vxor.u32 %v782, 2147483648
    %v784 = vmul.f32 %v783, 1.442695
    %v785 = vpow.pop %v784
    %v786 = vadd.f32 %v785, 1.0
    %v787 = vrcp.pop %v786
    %v788 = vmul.f32 %v786, %v787
    %v789 = vsub.f32 1.0, %v788
    %v790 = vmul.f32 %v787, %v789
    %v791 = vadd.f32 %v787, %v790
    %vm792 = vweird.f32 %v786
    %vm793 = vweird.f32 %v787
    %vm794 = vmor %vm792, %vm793
    %v795 = vsel %vm794, %v787, %v791
    %v796 = vand.u32 2147483647, %v786
    %vm797 = vcmp.eq.f32.partialorder %v796, 8.507059e+37
    %v798 = vand.u32 %v786, 2147483648
    %v799 = vor.u32 1.1754944e-38, %v798
    %v800 = vsel %vm797, %v799, %v795
    %v801 = vmul.f32 1.0, %v800
    %v802 = vadd.f32 %v736, %v766
    %v803 = vxor.u32 %v802, 2147483648
    %v804 = vmul.f32 %v803, 1.442695
    %v805 = vpow.pop %v804
    %v806 = vadd.f32 %v805, 1.0
    %v807 = vrcp.pop %v806
    %v808 = vmul.f32 %v806, %v807
    %v809 = vsub.f32 1.0, %v808
    %v810 = vmul.f32 %v807, %v809
    %v811 = vadd.f32 %v807, %v810
    %vm812 = vweird.f32 %v806
    %vm813 = vweird.f32 %v807
    %vm814 = vmor %vm812, %vm813
    %v815 = vsel %vm814, %v807, %v811
    %v816 = vand.u32 2147483647, %v806
    %vm817 = vcmp.eq.f32.partialorder %v816, 8.507059e+37
    %v818 = vand.u32 %v806, 2147483648
    %v819 = vor.u32 1.1754944e-38, %v818
    %v820 = vsel %vm817, %v819, %v815
    %v821 = vmul.f32 1.0, %v820
    %v822 = vadd.f32 %v779, %v291
    %v823 = vmul.f32 %v801, %v822
    %v824 = vadd.f32 %v738, %v823
    %v825 = vtanh.pop %v824
    %v826 = vsub.f32 1.0, %v821
    %v827 = vmul.f32 %v826, %v825
    %v828 = vmul.f32 %v821, %v723
    %v829 = vadd.f32 %v827, %v828
    %830 = vset.pattern.permute.xlu0 6
    %831 = vperm.xlu0 %830, %v117
    %v832 = vpop.permute.xlu0 %831
    %834 = vset.pattern.permute.xlu0 6
    %835 = vperm.xlu0 %834, %v84
    %v836 = vpop.permute.xlu0 %835
    %v838 = vsel %vm120, %v832, %v836
    %v839 = vmul.f32 %v838, %v132
    %v840 = vadd.f32 %v839, %v134
    %v841 = vmul.f32 %v838, %v136
    %v842 = vadd.f32 %v841, %v138
    %v843 = vmul.f32 %v838, %v140
    %v844 = vadd.f32 %v843, %v142
    %v845 = vpack.c.bf16 %v829, %v829
    %v847 = vsel %vm208, %v845, 0
    %849 = vmatpush.bf16.msra.mxu0 0
    %850 = vmatpush.bf16.msra.mxu0 0
    %851 = vmatpush.bf16.msra.mxu0 0
    %852 = vmatpush.bf16.msra.mxu0 0
    %853 = vmatpush.bf16.msra.mxu0 %v193
    %854 = vmatpush.bf16.msra.mxu0 %v190
    %855 = vmatpush.bf16.msra.mxu0 %v187
    %856 = vmatpush.bf16.msra.mxu0 %v184
    %857 = vmatmul.bf16.gmra.mxu0 %v847
    %v858 = vpop.f32.mrf.mxu0
    %v859 = vadd.f32 0.0, %v858
    %v860 = vpop.f32.mrf.mxu0
    %861 = vdwg.mxu0
    %862 = vmatpush.bf16.msra.mxu0 0
    %863 = vmatpush.bf16.msra.mxu0 0
    %864 = vmatpush.bf16.msra.mxu0 0
    %865 = vmatpush.bf16.msra.mxu0 0
    %866 = vmatpush.bf16.msra.mxu0 %v194
    %867 = vmatpush.bf16.msra.mxu0 %v191
    %868 = vmatpush.bf16.msra.mxu0 %v188
    %869 = vmatpush.bf16.msra.mxu0 %v185
    %870 = vmatmul.bf16.gmra.mxu0 %v847
    %v871 = vpop.f32.mrf.mxu0
    %v872 = vadd.f32 0.0, %v871
    %v873 = vpop.f32.mrf.mxu0
    %874 = vdwg.mxu0
    %875 = vmatpush.bf16.msra.mxu0 0
    %876 = vmatpush.bf16.msra.mxu0 0
    %877 = vmatpush.bf16.msra.mxu0 0
    %878 = vmatpush.bf16.msra.mxu0 0
    %879 = vmatpush.bf16.msra.mxu0 %v195
    %880 = vmatpush.bf16.msra.mxu0 %v192
    %881 = vmatpush.bf16.msra.mxu0 %v189
    %882 = vmatpush.bf16.msra.mxu0 %v186
    %883 = vmatmul.bf16.gmra.mxu0 %v847
    %v884 = vpop.f32.mrf.mxu0
    %v885 = vadd.f32 0.0, %v884
    %v886 = vpop.f32.mrf.mxu0
    %887 = vdwg.mxu0
    %v888 = vadd.f32 %v840, %v859
    %v889 = vxor.u32 %v888, 2147483648
    %v890 = vmul.f32 %v889, 1.442695
    %v891 = vpow.pop %v890
    %v892 = vadd.f32 %v891, 1.0
    %v893 = vrcp.pop %v892
    %v894 = vmul.f32 %v892, %v893
    %v895 = vsub.f32 1.0, %v894
    %v896 = vmul.f32 %v893, %v895
    %v897 = vadd.f32 %v893, %v896
    %vm898 = vweird.f32 %v892
    %vm899 = vweird.f32 %v893
    %vm900 = vmor %vm898, %vm899
    %v901 = vsel %vm900, %v893, %v897
    %v902 = vand.u32 2147483647, %v892
    %vm903 = vcmp.eq.f32.partialorder %v902, 8.507059e+37
    %v904 = vand.u32 %v892, 2147483648
    %v905 = vor.u32 1.1754944e-38, %v904
    %v906 = vsel %vm903, %v905, %v901
    %v907 = vmul.f32 1.0, %v906
    %v908 = vadd.f32 %v842, %v872
    %v909 = vxor.u32 %v908, 2147483648
    %v910 = vmul.f32 %v909, 1.442695
    %v911 = vpow.pop %v910
    %v912 = vadd.f32 %v911, 1.0
    %v913 = vrcp.pop %v912
    %v914 = vmul.f32 %v912, %v913
    %v915 = vsub.f32 1.0, %v914
    %v916 = vmul.f32 %v913, %v915
    %v917 = vadd.f32 %v913, %v916
    %vm918 = vweird.f32 %v912
    %vm919 = vweird.f32 %v913
    %vm920 = vmor %vm918, %vm919
    %v921 = vsel %vm920, %v913, %v917
    %v922 = vand.u32 2147483647, %v912
    %vm923 = vcmp.eq.f32.partialorder %v922, 8.507059e+37
    %v924 = vand.u32 %v912, 2147483648
    %v925 = vor.u32 1.1754944e-38, %v924
    %v926 = vsel %vm923, %v925, %v921
    %v927 = vmul.f32 1.0, %v926
    %v928 = vadd.f32 %v885, %v291
    %v929 = vmul.f32 %v907, %v928
    %v930 = vadd.f32 %v844, %v929
    %v931 = vtanh.pop %v930
    %v932 = vsub.f32 1.0, %v927
    %v933 = vmul.f32 %v932, %v931
    %v934 = vmul.f32 %v927, %v829
    %v935 = vadd.f32 %v933, %v934
    %936 = vset.pattern.permute.xlu0 7
    %937 = vperm.xlu0 %936, %v117
    %v938 = vpop.permute.xlu0 %937
    %940 = vset.pattern.permute.xlu0 7
    %941 = vperm.xlu0 %940, %v84
    %v942 = vpop.permute.xlu0 %941
    %v944 = vsel %vm120, %v938, %v942
    %v945 = vmul.f32 %v944, %v132
    %v946 = vadd.f32 %v945, %v134
    %v947 = vmul.f32 %v944, %v136
    %v948 = vadd.f32 %v947, %v138
    %v949 = vmul.f32 %v944, %v140
    %v950 = vadd.f32 %v949, %v142
    %v951 = vpack.c.bf16 %v935, %v935
    %v953 = vsel %vm208, %v951, 0
    %955 = vmatpush.bf16.msra.mxu0 0
    %956 = vmatpush.bf16.msra.mxu0 0
    %957 = vmatpush.bf16.msra.mxu0 0
    %958 = vmatpush.bf16.msra.mxu0 0
    %959 = vmatpush.bf16.msra.mxu0 %v193
    %960 = vmatpush.bf16.msra.mxu0 %v190
    %961 = vmatpush.bf16.msra.mxu0 %v187
    %962 = vmatpush.bf16.msra.mxu0 %v184
    %963 = vmatmul.bf16.gmra.mxu0 %v953
    %v964 = vpop.f32.mrf.mxu0
    %v965 = vadd.f32 0.0, %v964
    %v966 = vpop.f32.mrf.mxu0
    %967 = vdwg.mxu0
    %968 = vmatpush.bf16.msra.mxu0 0
    %969 = vmatpush.bf16.msra.mxu0 0
    %970 = vmatpush.bf16.msra.mxu0 0
    %971 = vmatpush.bf16.msra.mxu0 0
    %972 = vmatpush.bf16.msra.mxu0 %v194
    %973 = vmatpush.bf16.msra.mxu0 %v191
    %974 = vmatpush.bf16.msra.mxu0 %v188
    %975 = vmatpush.bf16.msra.mxu0 %v185
    %976 = vmatmul.bf16.gmra.mxu0 %v953
    %v977 = vpop.f32.mrf.mxu0
    %v978 = vadd.f32 0.0, %v977
    %v979 = vpop.f32.mrf.mxu0
    %980 = vdwg.mxu0
    %981 = vmatpush.bf16.msra.mxu0 0
    %982 = vmatpush.bf16.msra.mxu0 0
    %983 = vmatpush.bf16.msra.mxu0 0
    %984 = vmatpush.bf16.msra.mxu0 0
    %985 = vmatpush.bf16.msra.mxu0 %v195
    %986 = vmatpush.bf16.msra.mxu0 %v192
    %987 = vmatpush.bf16.msra.mxu0 %v189
    %988 = vmatpush.bf16.msra.mxu0 %v186
    %989 = vmatmul.bf16.gmra.mxu0 %v953
    %v990 = vpop.f32.mrf.mxu0
    %v991 = vadd.f32 0.0, %v990
    %v992 = vpop.f32.mrf.mxu0
    %993 = vdwg.mxu0
    %v994 = vadd.f32 %v946, %v965
    %v995 = vxor.u32 %v994, 2147483648
    %v996 = vmul.f32 %v995, 1.442695
    %v997 = vpow.pop %v996
    %v998 = vadd.f32 %v997, 1.0
    %v999 = vrcp.pop %v998
    %v1000 = vmul.f32 %v998, %v999
    %v1001 = vsub.f32 1.0, %v1000
    %v1002 = vmul.f32 %v999, %v1001
    %v1003 = vadd.f32 %v999, %v1002
    %vm1004 = vweird.f32 %v998
    %vm1005 = vweird.f32 %v999
    %vm1006 = vmor %vm1004, %vm1005
    %v1007 = vsel %vm1006, %v999, %v1003
    %v1008 = vand.u32 2147483647, %v998
    %vm1009 = vcmp.eq.f32.partialorder %v1008, 8.507059e+37
    %v1010 = vand.u32 %v998, 2147483648
    %v1011 = vor.u32 1.1754944e-38, %v1010
    %v1012 = vsel %vm1009, %v1011, %v1007
    %v1013 = vmul.f32 1.0, %v1012
    %v1014 = vadd.f32 %v948, %v978
    %v1015 = vxor.u32 %v1014, 2147483648
    %v1016 = vmul.f32 %v1015, 1.442695
    %v1017 = vpow.pop %v1016
    %v1018 = vadd.f32 %v1017, 1.0
    %v1019 = vrcp.pop %v1018
    %v1020 = vmul.f32 %v1018, %v1019
    %v1021 = vsub.f32 1.0, %v1020
    %v1022 = vmul.f32 %v1019, %v1021
    %v1023 = vadd.f32 %v1019, %v1022
    %vm1024 = vweird.f32 %v1018
    %vm1025 = vweird.f32 %v1019
    %vm1026 = vmor %vm1024, %vm1025
    %v1027 = vsel %vm1026, %v1019, %v1023
    %v1028 = vand.u32 2147483647, %v1018
    %vm1029 = vcmp.eq.f32.partialorder %v1028, 8.507059e+37
    %v1030 = vand.u32 %v1018, 2147483648
    %v1031 = vor.u32 1.1754944e-38, %v1030
    %v1032 = vsel %vm1029, %v1031, %v1027
    %v1033 = vmul.f32 1.0, %v1032
    %v1034 = vadd.f32 %v991, %v291
    %v1035 = vmul.f32 %v1013, %v1034
    %v1036 = vadd.f32 %v950, %v1035
    %v1037 = vtanh.pop %v1036
    %v1038 = vsub.f32 1.0, %v1033
    %v1039 = vmul.f32 %v1038, %v1037
    %v1040 = vmul.f32 %v1033, %v935
    %v1041 = vadd.f32 %v1039, %v1040
    %v1042 = vld [vmem:[%s2 + $0x7] sm:$0x1]
    %v1043 = vld [vmem:[%s2 + $0x8] sm:$0x1]
    %v1044 = vld [vmem:[%s2 + $0x9] sm:$0x1]
    %v1045 = vld [vmem:[%s2 + $0xa] sm:$0x1]
    %v1046 = vpack.c.bf16 %v1041, %v1041
    %v1047 = vld [vmem:[#allocation5] sm:$0xff]
    %v1048 = vld [vmem:[#allocation5 + $0x8] sm:$0xf]
    %v1049 = vld [vmem:[#allocation5 + $0xc] sm:$0xff]
    %v1050 = vld [vmem:[#allocation5 + $0x14] sm:$0xf]
    %v1051 = vld [vmem:[#allocation5 + $0x18] sm:$0xff]
    %v1052 = vld [vmem:[#allocation5 + $0x20] sm:$0xf]
    %v1053 = vld [vmem:[#allocation5 + $0x24] sm:$0xff]
    %v1054 = vld [vmem:[#allocation5 + $0x2c] sm:$0xf]
    %v1055 = vld [vmem:[#allocation5 + $0x30] sm:$0xff]
    %v1056 = vld [vmem:[#allocation5 + $0x38] sm:$0xf]
    %v1057 = vld [vmem:[#allocation5 + $0x3c] sm:$0xff]
    %v1058 = vld [vmem:[#allocation5 + $0x44] sm:$0xf]
    %v1059 = vld [vmem:[#allocation5 + $0x48] sm:$0xff]
    %v1060 = vld [vmem:[#allocation5 + $0x50] sm:$0xf]
    %v1061 = vld [vmem:[#allocation5 + $0x54] sm:$0xff]
    %v1062 = vld [vmem:[#allocation5 + $0x5c] sm:$0xf]
    %v1079 = vunpack.c.l.b16 %v1047
    %v1080 = vunpack.c.h.b16 %v1047
    %v1081 = vunpack.c.l.b16 %v1048
    %v1082 = vunpack.c.l.b16 %v1049
    %v1083 = vunpack.c.h.b16 %v1049
    %v1084 = vunpack.c.l.b16 %v1050
    %v1085 = vunpack.c.l.b16 %v1051
    %v1086 = vunpack.c.h.b16 %v1051
    %v1087 = vunpack.c.l.b16 %v1052
    %v1088 = vunpack.c.l.b16 %v1053
    %v1089 = vunpack.c.h.b16 %v1053
    %v1090 = vunpack.c.l.b16 %v1054
    %v1091 = vunpack.c.l.b16 %v1055
    %v1092 = vunpack.c.h.b16 %v1055
    %v1093 = vunpack.c.l.b16 %v1056
    %v1094 = vunpack.c.l.b16 %v1057
    %v1095 = vunpack.c.h.b16 %v1057
    %v1096 = vunpack.c.l.b16 %v1058
    %v1097 = vunpack.c.l.b16 %v1059
    %v1098 = vunpack.c.h.b16 %v1059
    %v1099 = vunpack.c.l.b16 %v1060
    %v1100 = vunpack.c.l.b16 %v1061
    %v1101 = vunpack.c.h.b16 %v1061
    %v1102 = vunpack.c.l.b16 %v1062
    %v1103 = vpack.c.b16 %v1082, %v1079
    %v1104 = vpack.c.b16 %v1083, %v1080
    %v1105 = vpack.c.b16 %v1084, %v1081
    %v1106 = vpack.c.b16 %v1088, %v1085
    %v1107 = vpack.c.b16 %v1089, %v1086
    %v1108 = vpack.c.b16 %v1090, %v1087
    %v1109 = vpack.c.b16 %v1094, %v1091
    %v1110 = vpack.c.b16 %v1095, %v1092
    %v1111 = vpack.c.b16 %v1096, %v1093
    %v1112 = vpack.c.b16 %v1100, %v1097
    %v1113 = vpack.c.b16 %v1101, %v1098
    %v1114 = vpack.c.b16 %v1102, %v1099
    %v1128 = vsel %vm208, %v1046, 0
    %1130 = vmatpush.bf16.msra.mxu0 0
    %1131 = vmatpush.bf16.msra.mxu0 0
    %1132 = vmatpush.bf16.msra.mxu0 0
    %1133 = vmatpush.bf16.msra.mxu0 0
    %1134 = vmatpush.bf16.msra.mxu0 %v1112
    %1135 = vmatpush.bf16.msra.mxu0 %v1109
    %1136 = vmatpush.bf16.msra.mxu0 %v1106
    %1137 = vmatpush.bf16.msra.mxu0 %v1103
    %1138 = vmatmul.bf16.gmra.mxu0 %v1128
    %v1139 = vpop.f32.mrf.mxu0
    %v1140 = vadd.f32 0.0, %v1139
    %v1141 = vpop.f32.mrf.mxu0
    %1142 = vdwg.mxu0
    %1143 = vmatpush.bf16.msra.mxu0 0
    %1144 = vmatpush.bf16.msra.mxu0 0
    %1145 = vmatpush.bf16.msra.mxu0 0
    %1146 = vmatpush.bf16.msra.mxu0 0
    %1147 = vmatpush.bf16.msra.mxu0 %v1113
    %1148 = vmatpush.bf16.msra.mxu0 %v1110
    %1149 = vmatpush.bf16.msra.mxu0 %v1107
    %1150 = vmatpush.bf16.msra.mxu0 %v1104
    %1151 = vmatmul.bf16.gmra.mxu0 %v1128
    %v1152 = vpop.f32.mrf.mxu0
    %v1153 = vadd.f32 0.0, %v1152
    %v1154 = vpop.f32.mrf.mxu0
    %1155 = vdwg.mxu0
    %1156 = vmatpush.bf16.msra.mxu0 0
    %1157 = vmatpush.bf16.msra.mxu0 0
    %1158 = vmatpush.bf16.msra.mxu0 0
    %1159 = vmatpush.bf16.msra.mxu0 0
    %1160 = vmatpush.bf16.msra.mxu0 %v1114
    %1161 = vmatpush.bf16.msra.mxu0 %v1111
    %1162 = vmatpush.bf16.msra.mxu0 %v1108
    %1163 = vmatpush.bf16.msra.mxu0 %v1105
    %1164 = vmatmul.bf16.gmra.mxu0 %v1128
    %v1165 = vpop.f32.mrf.mxu0
    %v1166 = vadd.f32 0.0, %v1165
    %v1167 = vpop.f32.mrf.mxu0
    %1168 = vdwg.mxu0
    %v1169 = vperm.slane %v1042, 0
    %v1170 = vadd.f32 %v1140, %v1169
    %v1171 = vxor.u32 %v1170, 2147483648
    %v1172 = vmul.f32 %v1171, 1.442695
    %v1173 = vpow.pop %v1172
    %v1174 = vadd.f32 %v1173, 1.0
    %v1175 = vrcp.pop %v1174
    %v1176 = vmul.f32 %v1174, %v1175
    %v1177 = vsub.f32 1.0, %v1176
    %v1178 = vmul.f32 %v1175, %v1177
    %v1179 = vadd.f32 %v1175, %v1178
    %vm1180 = vweird.f32 %v1174
    %vm1181 = vweird.f32 %v1175
    %vm1182 = vmor %vm1180, %vm1181
    %v1183 = vsel %vm1182, %v1175, %v1179
    %v1184 = vand.u32 2147483647, %v1174
    %vm1185 = vcmp.eq.f32.partialorder %v1184, 8.507059e+37
    %v1186 = vand.u32 %v1174, 2147483648
    %v1187 = vor.u32 1.1754944e-38, %v1186
    %v1188 = vsel %vm1185, %v1187, %v1183
    %v1189 = vmul.f32 1.0, %v1188
    %v1190 = vperm.slane %v1043, 0
    %v1191 = vadd.f32 %v1153, %v1190
    %v1192 = vxor.u32 %v1191, 2147483648
    %v1193 = vmul.f32 %v1192, 1.442695
    %v1194 = vpow.pop %v1193
    %v1195 = vadd.f32 %v1194, 1.0
    %v1196 = vrcp.pop %v1195
    %v1197 = vmul.f32 %v1195, %v1196
    %v1198 = vsub.f32 1.0, %v1197
    %v1199 = vmul.f32 %v1196, %v1198
    %v1200 = vadd.f32 %v1196, %v1199
    %vm1201 = vweird.f32 %v1195
    %vm1202 = vweird.f32 %v1196
    %vm1203 = vmor %vm1201, %vm1202
    %v1204 = vsel %vm1203, %v1196, %v1200
    %v1205 = vand.u32 2147483647, %v1195
    %vm1206 = vcmp.eq.f32.partialorder %v1205, 8.507059e+37
    %v1207 = vand.u32 %v1195, 2147483648
    %v1208 = vor.u32 1.1754944e-38, %v1207
    %v1209 = vsel %vm1206, %v1208, %v1204
    %v1210 = vmul.f32 1.0, %v1209
    %v1211 = vperm.slane %v1044, 0
    %v1212 = vadd.f32 %v1166, %v1211
    %v1213 = vperm.slane %v1045, 0
    %v1214 = vmul.f32 %v1189, %v1213
    %v1215 = vadd.f32 %v1212, %v1214
    %v1216 = vtanh.pop %v1215
    %v1217 = vsub.f32 1.0, %v1210
    %v1218 = vmul.f32 %v1217, %v1216
    %v1219 = vpack.c.bf16 %v1218, %v1218
    %v1220 = vld [vmem:[%s5] sm:$0xf]
    %v1221 = vld [vmem:[%s5 + $0x4] sm:$0xf]
    %v1222 = vld [vmem:[%s5 + $0x8] sm:$0xf]
    %v1223 = vld [vmem:[%s5 + $0xc] sm:$0xf]
    %v1224 = vld [vmem:[%s5 + $0x10] sm:$0xf]
    %v1225 = vld [vmem:[%s5 + $0x14] sm:$0xf]
    %v1226 = vld [vmem:[%s5 + $0x18] sm:$0xf]
    %v1227 = vld [vmem:[%s5 + $0x1c] sm:$0xf]
    %v1228 = vld [vmem:[%s6] sm:$0x1]
    %v1230 = vperm.slane %v1228, 0
    %v1240 = vunpack.c.l.b16 %v1220
    %v1241 = vunpack.c.l.b16 %v1221
    %v1242 = vunpack.c.l.b16 %v1222
    %v1243 = vunpack.c.l.b16 %v1223
    %v1244 = vunpack.c.l.b16 %v1224
    %v1245 = vunpack.c.l.b16 %v1225
    %v1246 = vunpack.c.l.b16 %v1226
    %v1247 = vunpack.c.l.b16 %v1227
    %v1248 = vpack.c.b16 %v1241, %v1240
    %v1249 = vpack.c.b16 %v1243, %v1242
    %v1250 = vpack.c.b16 %v1245, %v1244
    %v1251 = vpack.c.b16 %v1247, %v1246
    %v1257 = vsel %vm208, %v1219, 0
    %1259 = vmatpush.bf16.msra.mxu0 0
    %1260 = vmatpush.bf16.msra.mxu0 0
    %1261 = vmatpush.bf16.msra.mxu0 0
    %1262 = vmatpush.bf16.msra.mxu0 0
    %1263 = vmatpush.bf16.msra.mxu0 %v1251
    %1264 = vmatpush.bf16.msra.mxu0 %v1250
    %1265 = vmatpush.bf16.msra.mxu0 %v1249
    %1266 = vmatpush.bf16.msra.mxu0 %v1248
    %1267 = vmatmul.bf16.gmra.mxu0 %v1257
    %v1268 = vpop.f32.mrf.mxu0
    %v1269 = vadd.f32 %v1230, %v1268
    %v1270 = vpop.f32.mrf.mxu0
    %1271 = vdwg.mxu0
    %vm1272 = vcmask 25600
    %v1273 = vsel %vm1272, %v1269, -inf
    %1274 = vmax.xlane.f32.xlu0 %v1273
    %v1275 = vpop.xlane.xlu0 %1274
    %v1276 = vsub.f32 %v1269, %v1275
    %v1277 = vmul.f32 %v1276, 1.442695
    %v1278 = vpow.pop %v1277
    %v1279 = vsel %vm1272, %v1278, 0.0
    %1280 = vadd.xlane.f32.xlu0 %v1279
    %v1281 = vpop.xlane.xlu0 %1280
    %v1282 = vrcp.pop %v1281
    %v1283 = vmul.f32 %v1278, %v1282
    %1284 = vst.msk [vmem:[#allocation7] sm:$0x3] %vm1272, %v1283
    // Predicated region
    $region38: #{tpu_custom_call.1} parent=1 // pred_check
      _
    $region39: #{tpu_custom_call.1} parent=1 // pred_check_branch
      %1286 = sbr.rel (0) target = $region41
    $region40: #{tpu_custom_call.1} parent=1 // pred_region
      %1288 = vsyncadd [#allocation4], 0
      %s1290 = sshll.u32 [#allocation7], 4
      %s1291 = int_to_ptr.vmem [resolvable:$true] %s1290
      %s1292 = sshll.u32 %s7, 4
      %s1293 = int_to_ptr.hbm [resolvable:$true] %s1292
      %1295 = dma.vmem_to_hbm [thread:$0]  %s1291, 32, %s1293, [#allocation4]
    $region41: #{tpu_custom_call.1} parent=1 // pred_fallthru
      _
    // Predicated region
    $region42: #{tpu_custom_call.1} parent=1 // pred_check
      _
    $region43: #{tpu_custom_call.1} parent=1 // pred_check_branch
      %1297 = sbr.rel (0) target = $region45
    $region44: #{tpu_custom_call.1} parent=1 // pred_region
      %1299 = dma.done [#allocation4], 32
    $region45: #{tpu_custom_call.1} parent=1 // pred_fallthru
      _
    %1300 = vsyncpa [#allocation3], 1
    %1301 = vsyncpa [#allocation6], 1
    %1302 = vsyncpa [#allocation4], 1

</llo_original>
